<compile_context>
chip_gen: v7x
topology: tpu7x:2x2x1
jax: 0.10.0
libtpu: 0.0.40
codegen_flags: <defaults>
</compile_context>

<pallas_src>
import jax
import jax.numpy as jnp
from jax.experimental import pallas as pl
from jax.experimental.pallas import tpu as pltpu

# ---------------------------------------------------------------------------
# Module hyper-parameters (SPPMSE.__init__ defaults).
# ---------------------------------------------------------------------------
FRAME_LENGTH = 512
SHIFT_LENGTH = 256
XI_H1 = 31.622776601683793
P_H0 = 0.5
P_H1 = 0.5
FS = 16000
SMOOTHING_NOISE_TIME = 0.072
EPS = float(jnp.finfo(jnp.float32).eps)  # torch.finfo(float32).eps

# utils.time_to_smoothing_constant: alpha = exp(-shift / (fs * tau))
ALPHA = float(jnp.exp(-SHIFT_LENGTH / (FS * SMOOTHING_NOISE_TIME)))

C_PRIOR = P_H0 / P_H1 * (1.0 + XI_H1)      # prior * (1 + xi)
C_XI = XI_H1 / (1.0 + XI_H1)               # xi / (1 + xi)

N_FREQ = FRAME_LENGTH // 2 + 1             # 257 one-sided bins
F_PAD = ((N_FREQ + 127) // 128) * 128      # 384: lane-dense frequency width


# ---------------------------------------------------------------------------
# Glue: STFT framing (window applied; the DFT matmul happens in the kernel).
# ---------------------------------------------------------------------------
def _sqrt_hann_window(n):
    # torch.hann_window(periodic=True), sqrt=True in STFTTorch
    hann = 0.5 * (1.0 - jnp.cos(2.0 * jnp.pi * jnp.arange(n) / n))
    return jnp.sqrt(hann).astype(jnp.float32)


def _frame_signal(x, frame_length, shift):
    """x: [B, N] -> windowed frames [B, T, frame_length]."""
    n = x.shape[-1]
    num_frames = (n - frame_length) // shift + 1
    idx = jnp.arange(num_frames)[:, None] * shift + jnp.arange(frame_length)[None, :]
    frames = x[:, idx]                                  # [B, T, L]
    return frames * _sqrt_hann_window(frame_length)[None, None, :]


def _fused_dft_basis():
    """Fused, lane-padded one-sided DFT basis: [L, 2*F_PAD] = [cos | sin]."""
    l = jnp.arange(FRAME_LENGTH, dtype=jnp.float32)[:, None]
    f = jnp.arange(N_FREQ, dtype=jnp.float32)[None, :]
    ang = 2.0 * jnp.pi * l * f / FRAME_LENGTH
    cos_m = jnp.cos(ang)
    sin_m = -jnp.sin(ang)
    pad = F_PAD - N_FREQ                               # zero columns -> power 0
    cos_p = jnp.pad(cos_m, ((0, 0), (0, pad)))
    sin_p = jnp.pad(sin_m, ((0, 0), (0, pad)))
    return jnp.concatenate([cos_p, sin_p], axis=1).astype(jnp.float32)


def _recurrence_matrix(num_frames):
    """Lower-triangular [T, T] matrix A with var = A @ pn, where
       var[0] = pn[0]; var[t] = alpha*var[t-1] + (1-alpha)*pn[t]."""
    t = jnp.arange(num_frames)
    d = t[:, None] - t[None, :]                        # t - s
    pow_ = ALPHA ** jnp.maximum(d, 0).astype(jnp.float32)
    coef = jnp.where(t[None, :] == 0, 1.0, 1.0 - ALPHA)
    return jnp.where(d >= 0, coef * pow_, 0.0).astype(jnp.float32)


# ---------------------------------------------------------------------------
# Pallas kernel
# ---------------------------------------------------------------------------
def _make_kernel(m_blk, b_blk, t_pad, t_valid, b_total, num_blocks):
    need_frame_mask = t_pad != t_valid           # zero frames padded onto T
    need_batch_mask = (num_blocks * b_blk) != b_total   # zero batches padded

    def kernel(frames_ref, est_ref, w_ref, a_ref, oracle_ref, sse_ref):
        g = pl.program_id(0)

        # One fused DFT matmul per grid step (noise rows stacked on top of
        # noisy rows): [2*m_blk, L] bf16 @ [L, 2*F_PAD] bf16 -> f32.  (MXU)
        spec = jnp.dot(frames_ref[...], w_ref[...],
                       preferred_element_type=jnp.float32)   # [2*m_blk, 2*F_PAD]

        n_re = spec[:m_blk, :F_PAD]
        n_im = spec[:m_blk, F_PAD:]
        y_re = spec[m_blk:, :F_PAD]
        y_im = spec[m_blk:, F_PAD:]
        pn = n_re * n_re + n_im * n_im                  # |STFT noise|^2  (f32)
        py = y_re * y_re + y_im * y_im                  # |STFT noisy|^2  (f32)

        # Exponential smoothing of the noise power as one triangular matmul
        # (block-diagonal across the batch elements inside this block). f32.
        var = jnp.dot(a_ref[...], pn, preferred_element_type=jnp.float32)

        # a-posteriori SPP
        denom = 1.0 + C_PRIOR * jnp.exp(-(py / (var + EPS)) * C_XI)
        r = pl.reciprocal(denom, approx=True)           # EUP
        spp = r * (2.0 - denom * r)                     # one Newton step -> ~f32
        oracle_ref[...] = spp

        # Masked SSE: drop padded frequency lanes and (only when they exist)
        # padded frame / padded batch rows.  Mask terms are gated at trace
        # time so unpadded configs pay only for the lane mask.
        lane = jax.lax.broadcasted_iota(jnp.int32, (m_blk, F_PAD), 1)
        mask = lane < N_FREQ
        if need_frame_mask:
            frame = jax.lax.broadcasted_iota(
                jnp.int32, (b_blk, t_pad, F_PAD), 1).reshape(m_blk, F_PAD)
            mask = mask & (frame < t_valid)
        if need_batch_mask:
            belt = jax.lax.broadcasted_iota(
                jnp.int32, (b_blk, t_pad, F_PAD), 0).reshape(m_blk, F_PAD)
            mask = mask & ((g * b_blk + belt) < b_total)

        diff = jnp.where(mask, est_ref[...] - spp, 0.0)
        sse = jnp.sum(diff * diff)
        sse_ref[...] = jnp.zeros((8, 128), jnp.float32) + sse

    return kernel


@jax.jit
def spp_mse_pallas(noisy, noise, spp_estimate_bft):
    """
    noisy, noise:      [B, N]         time-domain signals
    spp_estimate_bft:  [B, F, T]      (already squeezed, PyTorch layout)
    Returns dict with 'loss' (scalar), 'spp_oracle' [B, F, T], 'spp_estimate'.
    """
    noise_frames = _frame_signal(noise, FRAME_LENGTH, SHIFT_LENGTH)   # [B, T, L]
    noisy_frames = _frame_signal(noisy, FRAME_LENGTH, SHIFT_LENGTH)   # [B, T, L]
    B, T, L = noise_frames.shape
    F = N_FREQ

    # ---- batch/frame blocking -------------------------------------------
    # Pad T to a multiple of 8 (sublane legality) instead of escalating to a
    # single giant block; target ~512 MXU rows per block; keep >= 2 grid
    # steps whenever B >= 2 so pipelining / megacore can engage.
    t_pad = ((T + 7) // 8) * 8
    target_rows = 512
    b_blk = max(1, min(B, max(1, target_rows // t_pad)))
    if B >= 2:
        b_blk = min(b_blk, max(1, B // 2))
    num_blocks = -(-B // b_blk)          # cdiv
    b_pad = num_blocks * b_blk
    m_blk = b_blk * t_pad

    pad_b = b_pad - B
    pad_t = t_pad - T

    noise_p = jnp.pad(noise_frames, ((0, pad_b), (0, pad_t), (0, 0)))
    noisy_p = jnp.pad(noisy_frames, ((0, pad_b), (0, pad_t), (0, 0)))

    # Stack noise / noisy at block granularity -> one [2*m_blk, L] block per
    # grid step, cast to bf16 for the MXU (accumulation stays f32).
    nb = noise_p.reshape(num_blocks, m_blk, L)
    yb = noisy_p.reshape(num_blocks, m_blk, L)
    frames = jnp.concatenate([nb, yb], axis=1)
    frames = frames.reshape(num_blocks * 2 * m_blk, L).astype(jnp.bfloat16)

    est_btf = jnp.transpose(spp_estimate_bft, (0, 2, 1)).astype(jnp.float32)
    est_p = jnp.pad(est_btf, ((0, pad_b), (0, pad_t), (0, F_PAD - F)))
    est_flat = est_p.reshape(b_pad * t_pad, F_PAD)

    w = _fused_dft_basis().astype(jnp.bfloat16)                      # [L, 2*F_PAD]
    a_bd = jnp.kron(jnp.eye(b_blk, dtype=jnp.float32),
                    _recurrence_matrix(t_pad))                       # [m_blk, m_blk] f32

    kernel = _make_kernel(m_blk, b_blk, t_pad, T, B, num_blocks)

    oracle_flat, sse = pl.pallas_call(
        kernel,
        out_shape=(
            jax.ShapeDtypeStruct((b_pad * t_pad, F_PAD), jnp.float32),
            jax.ShapeDtypeStruct((num_blocks, 8, 128), jnp.float32),
        ),
        grid_spec=pltpu.PrefetchScalarGridSpec(
            num_scalar_prefetch=0,
            grid=(num_blocks,),
            in_specs=[
                pl.BlockSpec((2 * m_blk, L), lambda i: (i, 0)),      # noise|noisy frames (bf16)
                pl.BlockSpec((m_blk, F_PAD), lambda i: (i, 0)),      # spp estimate (f32)
                pl.BlockSpec((L, 2 * F_PAD), lambda i: (0, 0)),      # fused DFT basis (bf16)
                pl.BlockSpec((m_blk, m_blk), lambda i: (0, 0)),      # recurrence matrix (f32)
            ],
            out_specs=[
                pl.BlockSpec((m_blk, F_PAD), lambda i: (i, 0)),      # spp oracle
                pl.BlockSpec((None, 8, 128), lambda i: (i, 0, 0)),   # per-block SSE
            ],
        ),
        compiler_params=pltpu.CompilerParams(
            dimension_semantics=("parallel",),
            vmem_limit_bytes=40 * 1024 * 1024),
    )(frames, est_flat, w, a_bd)

    loss = jnp.sum(sse[:, 0, 0]) / (B * T * F)
    oracle = oracle_flat.reshape(b_pad, t_pad, F_PAD)[:B, :T, :F]
    spp_oracle = jnp.transpose(oracle, (0, 2, 1))                    # back to [B, F, T]
    return {"loss": loss,
            "spp_oracle": spp_oracle,
            "spp_estimate": spp_estimate_bft}


# ---------------------------------------------------------------------------
# Pure-JAX reference (mirrors the PyTorch forward) for a sanity check.
# ---------------------------------------------------------------------------
def spp_mse_reference(noisy, noise, spp_estimate_bft):
    noise_frames = _frame_signal(noise, FRAME_LENGTH, SHIFT_LENGTH)
    noisy_frames = _frame_signal(noisy, FRAME_LENGTH, SHIFT_LENGTH)

    l = jnp.arange(FRAME_LENGTH, dtype=jnp.float32)[:, None]
    f = jnp.arange(N_FREQ, dtype=jnp.float32)[None, :]
    ang = 2.0 * jnp.pi * l * f / FRAME_LENGTH
    cos_m, sin_m = jnp.cos(ang), -jnp.sin(ang)

    pn = (noise_frames @ cos_m) ** 2 + (noise_frames @ sin_m) ** 2   # [B, T, F]
    py = (noisy_frames @ cos_m) ** 2 + (noisy_frames @ sin_m) ** 2

    def step(var, p_t):
        var = ALPHA * var + (1.0 - ALPHA) * p_t
        return var, var

    var0 = pn[:, 0, :]
    _, var_rest = jax.lax.scan(step, var0, jnp.moveaxis(pn[:, 1:, :], 1, 0))
    var = jnp.concatenate([var0[None], var_rest], axis=0)            # [T, B, F]
    var = jnp.moveaxis(var, 0, 1)                                    # [B, T, F]

    oracle = 1.0 / (1.0 + C_PRIOR * jnp.exp(-py / (var + EPS) * C_XI))
    spp_est_btf = jnp.transpose(spp_estimate_bft, (0, 2, 1))
    loss = jnp.mean((spp_est_btf - oracle) ** 2)
    return loss, jnp.transpose(oracle, (0, 2, 1))


if __name__ == "__main__":
    def run_case(key, batch, t_frames):
        k_clean, k_noise, k_spp = jax.random.split(key, 3)
        n_samples = FRAME_LENGTH + (t_frames - 1) * SHIFT_LENGTH
        f_bins = N_FREQ

        clean = 0.5 * jax.random.normal(k_clean, (batch, n_samples), dtype=jnp.float32)
        noise = 0.2 * jax.random.normal(k_noise, (batch, n_samples), dtype=jnp.float32)
        noisy = clean + noise                               # extras['input']
        # outputs['spp_estimate'].squeeze(1): [B, F, T] in (0, 1)
        spp_estimate = jax.random.uniform(k_spp, (batch, f_bins, t_frames),
                                          dtype=jnp.float32)

        out = spp_mse_pallas(noisy, noise, spp_estimate)
        jax.block_until_ready(out)

        ref_loss, ref_oracle = spp_mse_reference(noisy, noise, spp_estimate)
        # Tolerances account for the bf16 DFT-matmul operands (the reference
        # keeps the whole pipeline in f32, as PyTorch does).
        assert jnp.allclose(out["loss"], ref_loss, rtol=3e-2, atol=1e-4), (
            out["loss"], ref_loss)
        assert jnp.allclose(out["spp_oracle"], ref_oracle, rtol=5e-2, atol=3.5e-2), (
            float(jnp.max(jnp.abs(out["spp_oracle"] - ref_oracle))))
        return out

    key = jax.random.PRNGKey(0)
    k1, k2 = jax.random.split(key)

    # Case 1: B=2, T=8  -> no padding, 2 grid steps (pipelining / megacore).
    run_case(k1, batch=2, t_frames=8)
    # Case 2: B=5, T=6  -> exercises the frame-pad and batch-pad row masks.
    run_case(k2, batch=5, t_frames=6)

    print("KERNEL_OK")
</pallas_src>

<mosaic_0001>
module attributes {stable_mosaic.version = 11 : i64} {
  func.func private @main(%arg0: i32) attributes {dimension_semantics = [#tpu.dimension_semantics<core_parallel>], iteration_bounds = array<i64: 2>, tpu.core_type = #tpu.core_type<sc_scalar_subcore>, window_params = []} {
    return
  }
}

module attributes {stable_mosaic.version = 11 : i64} {
  func.func private @main(%arg0: i32) attributes {dimension_semantics = [#tpu.dimension_semantics<core_parallel>], iteration_bounds = array<i64: 2>, tpu.core_type = #tpu.core_type<sc_scalar_subcore>, window_params = []} {
    return
  }
}

module attributes {stable_mosaic.version = 11 : i64} {
  func.func @kernel(%arg0: i32, %arg1: memref<16x512xbf16, #tpu.memory_space<vmem>>, %arg2: memref<8x384xf32, #tpu.memory_space<vmem>>, %arg3: memref<512x768xbf16, #tpu.memory_space<vmem>>, %arg4: memref<8x8xf32, #tpu.memory_space<vmem>>, %arg5: memref<8x384xf32, #tpu.memory_space<vmem>>, %arg6: memref<1x8x128xf32, #tpu.memory_space<vmem>>) attributes {dimension_semantics = [#tpu.dimension_semantics<parallel>], iteration_bounds = array<i64: 2>, scalar_prefetch = 0 : i64, scratch_operands = 0 : i64, tpu.core_type = #tpu.core_type<tc>, window_params = [{transform_indices = @transform_0, window_bounds = array<i64: 16, 512>}, {transform_indices = @transform_1, window_bounds = array<i64: 8, 384>}, {pipeline_mode = #tpu.pipeline_mode<synchronous>, transform_indices = @transform_2, window_bounds = array<i64: 512, 768>}, {pipeline_mode = #tpu.pipeline_mode<synchronous>, transform_indices = @transform_3, window_bounds = array<i64: 8, 8>}, {transform_indices = @transform_4, window_bounds = array<i64: 8, 384>}, {transform_indices = @transform_5, window_bounds = array<i64: 1, 8, 128>}]} {
    %c0 = arith.constant 0 : index
    %c0_0 = arith.constant 0 : index
    %0 = vector.load %arg1[%c0, %c0_0] : memref<16x512xbf16, #tpu.memory_space<vmem>>, vector<16x512xbf16>
    %c0_1 = arith.constant 0 : index
    %c0_2 = arith.constant 0 : index
    %1 = vector.load %arg3[%c0_1, %c0_2] : memref<512x768xbf16, #tpu.memory_space<vmem>>, vector<512x768xbf16>
    %cst = arith.constant dense<0.000000e+00> : vector<16x768xf32>
    %2 = tpu.matmul %0, %1, %cst {dimension_numbers = #tpu.dot_dimension_numbers<[1], [0], [0], [1], [0, 0, 1, 1], [], []>} : vector<16x512xbf16>, vector<512x768xbf16>, vector<16x768xf32> -> vector<16x768xf32>
    %3 = vector.extract_strided_slice %2 {offsets = [0, 0], sizes = [8, 384], strides = [1, 1]} : vector<16x768xf32> to vector<8x384xf32>
    %4 = vector.extract_strided_slice %2 {offsets = [0, 384], sizes = [8, 384], strides = [1, 1]} : vector<16x768xf32> to vector<8x384xf32>
    %5 = vector.extract_strided_slice %2 {offsets = [8, 0], sizes = [8, 384], strides = [1, 1]} : vector<16x768xf32> to vector<8x384xf32>
    %6 = vector.extract_strided_slice %2 {offsets = [8, 384], sizes = [8, 384], strides = [1, 1]} : vector<16x768xf32> to vector<8x384xf32>
    %7 = arith.mulf %3, %3 : vector<8x384xf32>
    %8 = arith.mulf %4, %4 : vector<8x384xf32>
    %9 = arith.addf %7, %8 : vector<8x384xf32>
    %10 = arith.mulf %5, %5 : vector<8x384xf32>
    %11 = arith.mulf %6, %6 : vector<8x384xf32>
    %12 = arith.addf %10, %11 : vector<8x384xf32>
    %c0_3 = arith.constant 0 : index
    %c0_4 = arith.constant 0 : index
    %13 = vector.load %arg4[%c0_3, %c0_4] : memref<8x8xf32, #tpu.memory_space<vmem>>, vector<8x8xf32>
    %cst_5 = arith.constant dense<0.000000e+00> : vector<8x384xf32>
    %14 = tpu.matmul %13, %9, %cst_5 {dimension_numbers = #tpu.dot_dimension_numbers<[1], [0], [0], [1], [0, 0, 1, 1], [], []>} : vector<8x8xf32>, vector<8x384xf32>, vector<8x384xf32> -> vector<8x384xf32>
    %cst_6 = arith.constant 1.1920929E-7 : f32
    %15 = vector.broadcast %cst_6 : f32 to vector<8x384xf32>
    %16 = arith.addf %14, %15 : vector<8x384xf32>
    %17 = arith.divf %12, %16 : vector<8x384xf32>
    %cst_7 = arith.constant 0.000000e+00 : f32
    %18 = vector.broadcast %cst_7 : f32 to vector<8x384xf32>
    %19 = arith.subf %18, %17 : vector<8x384xf32>
    %cst_8 = arith.constant 0.969346582 : f32
    %20 = vector.broadcast %cst_8 : f32 to vector<8x384xf32>
    %21 = arith.mulf %19, %20 : vector<8x384xf32>
    %22 = math.exp %21 : vector<8x384xf32>
    %cst_9 = arith.constant 32.622776 : f32
    %23 = vector.broadcast %cst_9 : f32 to vector<8x384xf32>
    %24 = arith.mulf %23, %22 : vector<8x384xf32>
    %cst_10 = arith.constant 1.000000e+00 : f32
    %25 = vector.broadcast %cst_10 : f32 to vector<8x384xf32>
    %26 = arith.addf %25, %24 : vector<8x384xf32>
    %27 = tpu.reciprocal %26 {approx = true} : vector<8x384xf32> -> vector<8x384xf32>
    %28 = arith.mulf %26, %27 : vector<8x384xf32>
    %cst_11 = arith.constant 2.000000e+00 : f32
    %29 = vector.broadcast %cst_11 : f32 to vector<8x384xf32>
    %30 = arith.subf %29, %28 : vector<8x384xf32>
    %31 = arith.mulf %27, %30 : vector<8x384xf32>
    %c0_12 = arith.constant 0 : index
    %c0_13 = arith.constant 0 : index
    %32 = vector.load %arg5[%c0_12, %c0_13] : memref<8x384xf32, #tpu.memory_space<vmem>>, vector<8x384xf32>
    tpu.vector_store %arg5[%c0_12, %c0_13], %31 {strides = array<i32>} : memref<8x384xf32, #tpu.memory_space<vmem>>, vector<8x384xf32>,
    %33 = tpu.iota {dimensions = array<i32: 1>} : vector<8x384xi32>
    %c257_i32 = arith.constant 257 : i32
    %34 = vector.broadcast %c257_i32 : i32 to vector<8x384xi32>
    %35 = arith.cmpi slt, %33, %34 : vector<8x384xi32>
    %c0_14 = arith.constant 0 : index
    %c0_15 = arith.constant 0 : index
    %36 = vector.load %arg2[%c0_14, %c0_15] : memref<8x384xf32, #tpu.memory_space<vmem>>, vector<8x384xf32>
    %37 = arith.subf %36, %31 : vector<8x384xf32>
    %cst_16 = arith.constant 0.000000e+00 : f32
    %38 = vector.broadcast %cst_16 : f32 to vector<8x384xf32>
    %39 = arith.select %35, %37, %38 : vector<8x384xi1>, vector<8x384xf32>
    %40 = arith.mulf %39, %39 : vector<8x384xf32>
    %41 = vector.shape_cast %40 : vector<8x384xf32> to vector<1x8x384xf32>
    %cst_17 = arith.constant dense<0.000000e+00> : vector<1xf32>
    %42 = vector.multi_reduction <add>, %41, %cst_17 [1, 2] : vector<1x8x384xf32> to vector<1xf32>
    %43 = vector.shape_cast %42 : vector<1xf32> to vector<1x1x1xf32>
    %44 = vector.extract %43[0, 0, 0] : f32 from vector<1x1x1xf32>
    %cst_18 = arith.constant 0.000000e+00 : f32
    %45 = vector.broadcast %cst_18 : f32 to vector<8x128xf32>
    %46 = vector.broadcast %44 : f32 to vector<8x128xf32>
    %47 = arith.addf %45, %46 : vector<8x128xf32>
    %c0_19 = arith.constant 0 : index
    %c0_20 = arith.constant 0 : index
    %c0_21 = arith.constant 0 : index
    %48 = vector.load %arg6[%c0_19, %c0_20, %c0_21] : memref<1x8x128xf32, #tpu.memory_space<vmem>>, vector<1x8x128xf32>
    %49 = vector.shape_cast %48 : vector<1x8x128xf32> to vector<8x128xf32>
    %50 = vector.shape_cast %47 : vector<8x128xf32> to vector<1x8x128xf32>
    tpu.vector_store %arg6[%c0_19, %c0_20, %c0_21], %50 {strides = array<i32>} : memref<1x8x128xf32, #tpu.memory_space<vmem>>, vector<1x8x128xf32>,
    return
  }
  func.func @transform_0(%arg0: i32) -> (i32, i32) {
    %c0_i32 = arith.constant 0 : i32
    %c0_i32_0 = arith.constant 0 : i32
    return %arg0, %c0_i32 : i32, i32
  }
  func.func @transform_1(%arg0: i32) -> (i32, i32) {
    %c0_i32 = arith.constant 0 : i32
    %c0_i32_0 = arith.constant 0 : i32
    return %arg0, %c0_i32 : i32, i32
  }
  func.func @transform_2(%arg0: i32) -> (i32, i32) {
    %c0_i32 = arith.constant 0 : i32
    %c0_i32_0 = arith.constant 0 : i32
    %c0_i32_1 = arith.constant 0 : i32
    return %c0_i32, %c0_i32_0 : i32, i32
  }
  func.func @transform_3(%arg0: i32) -> (i32, i32) {
    %c0_i32 = arith.constant 0 : i32
    %c0_i32_0 = arith.constant 0 : i32
    %c0_i32_1 = arith.constant 0 : i32
    return %c0_i32, %c0_i32_0 : i32, i32
  }
  func.func @transform_4(%arg0: i32) -> (i32, i32) {
    %c0_i32 = arith.constant 0 : i32
    %c0_i32_0 = arith.constant 0 : i32
    return %arg0, %c0_i32 : i32, i32
  }
  func.func @transform_5(%arg0: i32) -> (i32, i32, i32) {
    %c0_i32 = arith.constant 0 : i32
    %c0_i32_0 = arith.constant 0 : i32
    %c0_i32_1 = arith.constant 0 : i32
    return %arg0, %c0_i32, %c0_i32_0 : i32, i32, i32
  }
}

</mosaic_0001>

<llo_original>
// kernel: spp_mse_pallas.1
$region0: #{spp_mse_pallas.1}
  #allocation0 [shape = 'u32[]', space=smem, size = 0x4, offset = 0x4, fixed_abs, tag = 'smem constant byte address 0x4 - core index']
  #allocation1 [shape = 'u32[144,128]{1,0:T(1,128)}', space=vmem, size = 0x12000, scoped, tag = 'internal scratch']
  %s0 = inlined_call_operand.vmem [shape: bf16[32,512], index: 0, kind: input, shape index: {}]
  %s1 = inlined_call_operand.vmem [shape: f32[16,384], index: 1, kind: input, shape index: {}]
  %s2 = inlined_call_operand.vmem [shape: bf16[512,768], index: 2, kind: input, shape index: {}]
  %s3 = inlined_call_operand.vmem [shape: f32[8,8], index: 3, kind: input, shape index: {}]
  %s4 = inlined_call_operand.vmem [shape: f32[16,384], index: 4, kind: output, shape index: {0}]
  %s5 = inlined_call_operand.vmem [shape: f32[2,8,128], index: 5, kind: output, shape index: {1}]
  %6 = xla_tuple %s4, %s5
  %s7 = sld [smem:[#allocation0]]
  $region57: #{spp_mse_pallas.1} parent=0
    _
  %s9 = ssub.s32 1, %s7
  %s10 = scalar_select 0, %s9, %s7
  loop: start=0, step=1, limit=4
  $region2: #{spp_mse_pallas.1} parent=0 // loop_pre_header
    _
  $region3: #{spp_mse_pallas.1} parent=0 // loop_header
    %s12 = sphi 0, %s16
    %p13 = scmp.ge.s32.totalorder %s12, 4
    %s22 = sphi 0, %s24
    %s25 = sphi 0, %s22
    %s26 = sphi 0, %s25
    %s42 = sphi 0, %s26
    %s48 = sphi 0, %s50
    %s51 = sphi 0, %s48
    %s52 = sphi 0, %s51
    %s68 = sphi 0, %s52
    %s72 = sphi 0, %s72
    %s74 = sphi 0, %s72
    %s75 = sphi 0, %s74
    %s89 = sphi 0, %s75
    %s93 = sphi 0, %s93
    %s95 = sphi 0, %s93
    %s96 = sphi 0, %s95
    %s110 = sphi 0, %s96
    %s116 = sphi 0, %s118
    %s119 = sphi 0, %s116
    %s120 = sphi 0, %s119
    %s136 = sphi 0, %s120
    %s142 = sphi 0, %s144
    %s145 = sphi 0, %s142
    %s146 = sphi 0, %s145
    %s162 = sphi 0, %s146
  $region4: #{spp_mse_pallas.1} parent=0 // loop_header_branch
    %15 = sbr.rel (%p13) target = $region8
  $region5: #{spp_mse_pallas.1} parent=0 // loop_body
    %s17 = ssub.s32 %s12, 1
    %s18 = ssub.s32 %s12, 2
    %s19 = sadd.s32 %s12, 1
    %s20 = ssub.s32 %s12, %s19
    %p21 = scmp.eq.s32.totalorder %s20, 0
    %s23 = sadd.s32 %s22, 1
    %s24 = scalar_select %p21, %s22, %s23
    %p27 = pneg %p21
    %p28 = scmp.eq.s32.totalorder %s12, 1
    %p29 = por %p27, %p28
    %p30 = scmp.ne.s32.totalorder %s22, %s25
    %p31 = scmp.eq.s32.totalorder %s12, 0
    %p32 = por %p30, %p31
    %p33 = scmp.ne.s32.totalorder %s22, %s25
    %p34 = scmp.eq.s32.totalorder %s17, 1
    %p35 = por %p33, %p34
    %p36 = scmp.ne.s32.totalorder %s25, %s26
    %p37 = scmp.eq.s32.totalorder %s17, 0
    %p38 = por %p36, %p37
    %p39 = scmp.ne.s32.totalorder %s25, %s26
    %p40 = scmp.eq.s32.totalorder %s18, 1
    %p41 = por %p39, %p40
    %p43 = scmp.ne.s32.totalorder %s26, %s42
    %p44 = scmp.eq.s32.totalorder %s18, 0
    %p45 = por %p43, %p44
    %s46 = ssub.s32 %s12, %s19
    %p47 = scmp.eq.s32.totalorder %s46, 0
    %s49 = sadd.s32 %s48, 1
    %s50 = scalar_select %p47, %s48, %s49
    %p53 = pneg %p47
    %p54 = scmp.eq.s32.totalorder %s12, 1
    %p55 = por %p53, %p54
    %p56 = scmp.ne.s32.totalorder %s48, %s51
    %p57 = scmp.eq.s32.totalorder %s12, 0
    %p58 = por %p56, %p57
    %p59 = scmp.ne.s32.totalorder %s48, %s51
    %p60 = scmp.eq.s32.totalorder %s17, 1
    %p61 = por %p59, %p60
    %p62 = scmp.ne.s32.totalorder %s51, %s52
    %p63 = scmp.eq.s32.totalorder %s17, 0
    %p64 = por %p62, %p63
    %p65 = scmp.ne.s32.totalorder %s51, %s52
    %p66 = scmp.eq.s32.totalorder %s18, 1
    %p67 = por %p65, %p66
    %p69 = scmp.ne.s32.totalorder %s52, %s68
    %p70 = scmp.eq.s32.totalorder %s18, 0
    %p71 = por %p69, %p70
    %s73 = sadd.s32 %s72, 1
    %p76 = scmp.eq.s32.totalorder %s12, 1
    %p77 = scmp.ne.s32.totalorder %s72, %s74
    %p78 = scmp.eq.s32.totalorder %s12, 0
    %p79 = por %p77, %p78
    %p80 = scmp.ne.s32.totalorder %s72, %s74
    %p81 = scmp.eq.s32.totalorder %s17, 1
    %p82 = por %p80, %p81
    %p83 = scmp.ne.s32.totalorder %s74, %s75
    %p84 = scmp.eq.s32.totalorder %s17, 0
    %p85 = por %p83, %p84
    %p86 = scmp.ne.s32.totalorder %s74, %s75
    %p87 = scmp.eq.s32.totalorder %s18, 1
    %p88 = por %p86, %p87
    %p90 = scmp.ne.s32.totalorder %s75, %s89
    %p91 = scmp.eq.s32.totalorder %s18, 0
    %p92 = por %p90, %p91
    %s94 = sadd.s32 %s93, 1
    %p97 = scmp.eq.s32.totalorder %s12, 1
    %p98 = scmp.ne.s32.totalorder %s93, %s95
    %p99 = scmp.eq.s32.totalorder %s12, 0
    %p100 = por %p98, %p99
    %p101 = scmp.ne.s32.totalorder %s93, %s95
    %p102 = scmp.eq.s32.totalorder %s17, 1
    %p103 = por %p101, %p102
    %p104 = scmp.ne.s32.totalorder %s95, %s96
    %p105 = scmp.eq.s32.totalorder %s17, 0
    %p106 = por %p104, %p105
    %p107 = scmp.ne.s32.totalorder %s95, %s96
    %p108 = scmp.eq.s32.totalorder %s18, 1
    %p109 = por %p107, %p108
    %p111 = scmp.ne.s32.totalorder %s96, %s110
    %p112 = scmp.eq.s32.totalorder %s18, 0
    %p113 = por %p111, %p112
    %s114 = ssub.s32 %s12, %s19
    %p115 = scmp.eq.s32.totalorder %s114, 0
    %s117 = sadd.s32 %s116, 1
    %s118 = scalar_select %p115, %s116, %s117
    %p121 = pneg %p115
    %p122 = scmp.eq.s32.totalorder %s12, 1
    %p123 = por %p121, %p122
    %p124 = scmp.ne.s32.totalorder %s116, %s119
    %p125 = scmp.eq.s32.totalorder %s12, 0
    %p126 = por %p124, %p125
    %p127 = scmp.ne.s32.totalorder %s116, %s119
    %p128 = scmp.eq.s32.totalorder %s17, 1
    %p129 = por %p127, %p128
    %p130 = scmp.ne.s32.totalorder %s119, %s120
    %p131 = scmp.eq.s32.totalorder %s17, 0
    %p132 = por %p130, %p131
    %p133 = scmp.ne.s32.totalorder %s119, %s120
    %p134 = scmp.eq.s32.totalorder %s18, 1
    %p135 = por %p133, %p134
    %p137 = scmp.ne.s32.totalorder %s120, %s136
    %p138 = scmp.eq.s32.totalorder %s18, 0
    %p139 = por %p137, %p138
    %s140 = ssub.s32 %s12, %s19
    %p141 = scmp.eq.s32.totalorder %s140, 0
    %s143 = sadd.s32 %s142, 1
    %s144 = scalar_select %p141, %s142, %s143
    %p147 = pneg %p141
    %p148 = scmp.eq.s32.totalorder %s12, 1
    %p149 = por %p147, %p148
    %p150 = scmp.ne.s32.totalorder %s142, %s145
    %p151 = scmp.eq.s32.totalorder %s12, 0
    %p152 = por %p150, %p151
    %p153 = scmp.ne.s32.totalorder %s142, %s145
    %p154 = scmp.eq.s32.totalorder %s17, 1
    %p155 = por %p153, %p154
    %p156 = scmp.ne.s32.totalorder %s145, %s146
    %p157 = scmp.eq.s32.totalorder %s17, 0
    %p158 = por %p156, %p157
    %p159 = scmp.ne.s32.totalorder %s145, %s146
    %p160 = scmp.eq.s32.totalorder %s18, 1
    %p161 = por %p159, %p160
    %p163 = scmp.ne.s32.totalorder %s146, %s162
    %p164 = scmp.eq.s32.totalorder %s18, 0
    %p165 = por %p163, %p164
    %p166 = scmp.le.s32.totalorder 1, %s12
    %p167 = scmp.lt.s32.totalorder %s12, 3
    %p168 = pnand %p166, %p167
    %p169 = pneg %p168
    // Predicated region
    $region9: #{spp_mse_pallas.1} parent=5 // pred_check
      _
    $region10: #{spp_mse_pallas.1} parent=5 // pred_check_branch
      %171 = sbr.rel (%p168) target = $region12
    $region11: #{spp_mse_pallas.1} parent=5 // pred_region
      %s172 = ssub.s32 %s12, 1
      // Predicated region
      $region13: #{spp_mse_pallas.1} parent=11 // pred_check
        %p173 = pneg %p85
      $region14: #{spp_mse_pallas.1} parent=11 // pred_check_branch
        %175 = sbr.rel (%p173) target = $region16
      $region15: #{spp_mse_pallas.1} parent=11 // pred_region
        _
      $region16: #{spp_mse_pallas.1} parent=11 // pred_fallthru
        _
      // Predicated region
      $region17: #{spp_mse_pallas.1} parent=11 // pred_check
        %p176 = pneg %p106
      $region18: #{spp_mse_pallas.1} parent=11 // pred_check_branch
        %178 = sbr.rel (%p176) target = $region20
      $region19: #{spp_mse_pallas.1} parent=11 // pred_region
        _
      $region20: #{spp_mse_pallas.1} parent=11 // pred_fallthru
        _
    $region12: #{spp_mse_pallas.1} parent=5 // pred_fallthru
      _
    %p179 = scmp.lt.s32.totalorder %s12, 2
    // Predicated region
    $region21: #{spp_mse_pallas.1} parent=5 // pred_check
      %p180 = pneg %p179
    $region22: #{spp_mse_pallas.1} parent=5 // pred_check_branch
      %182 = sbr.rel (%p180) target = $region24
    $region23: #{spp_mse_pallas.1} parent=5 // pred_region
      // Predicated region
      $region25: #{spp_mse_pallas.1} parent=23 // pred_check
        %p183 = pneg %p32
      $region26: #{spp_mse_pallas.1} parent=23 // pred_check_branch
        %185 = sbr.rel (%p183) target = $region28
      $region27: #{spp_mse_pallas.1} parent=23 // pred_region
        %s186 = smul.u32 2, %s12
        %p187 = scmp.lt.s32.totalorder %s186, 3
        %s188 = scalar_select %p187, %s186, 3
        %s189 = smul.addr %s188, 4
        %s190 = smul.addr %s189, 4
        %s191 = scalar_lea.vmem %s0, %s190
        %s192 = smul.u32 2, %s12
      $region28: #{spp_mse_pallas.1} parent=23 // pred_fallthru
        _
      // Predicated region
      $region29: #{spp_mse_pallas.1} parent=23 // pred_check
        %p193 = pneg %p58
      $region30: #{spp_mse_pallas.1} parent=23 // pred_check_branch
        %195 = sbr.rel (%p193) target = $region32
      $region31: #{spp_mse_pallas.1} parent=23 // pred_region
        %p196 = scmp.lt.s32.totalorder %s12, 1
        %s197 = scalar_select %p196, %s12, 1
        %s198 = smul.addr %s197, 3
        %s199 = smul.addr %s198, 8
        %s200 = scalar_lea.vmem %s1, %s199
      $region32: #{spp_mse_pallas.1} parent=23 // pred_fallthru
        _
    $region24: #{spp_mse_pallas.1} parent=5 // pred_fallthru
      _
    %p201 = scmp.le.s32.totalorder 1, %s12
    %p202 = scmp.lt.s32.totalorder %s12, 3
    %p203 = pnand %p201, %p202
    %p204 = pneg %p203
    // Predicated region
    $region33: #{spp_mse_pallas.1} parent=5 // pred_check
      _
    $region34: #{spp_mse_pallas.1} parent=5 // pred_check_branch
      %206 = sbr.rel (%p203) target = $region36
    $region35: #{spp_mse_pallas.1} parent=5 // pred_region
      %s207 = ssub.s32 %s12, 1
      %s208 = smul.u32 2, %s17
      %p209 = scmp.lt.s32.totalorder %s208, 3
      %s210 = scalar_select %p209, %s208, 3
      %s211 = smul.addr %s210, 4
      %s212 = smul.addr %s211, 4
      %s213 = scalar_lea.vmem %s0, %s212
      %p214 = pneg %p38
      %p215 = pneg %p35
      %p216 = scmp.lt.s32.totalorder %s17, 1
      %s217 = scalar_select %p216, %s17, 1
      %s218 = smul.addr %s217, 3
      %s219 = smul.addr %s218, 8
      %s220 = scalar_lea.vmem %s1, %s219
      %p221 = pneg %p64
      %p222 = pneg %p61
      %p223 = pneg %p85
      %p224 = pneg %p82
      %p225 = pneg %p106
      %p226 = pneg %p103
      %p227 = pneg %p132
      %p228 = pneg %p129
      %p229 = scmp.lt.s32.totalorder %s17, 1
      %s230 = scalar_select %p229, %s17, 1
      %s231 = smul.addr %s230, 3
      %s232 = smul.addr %s231, 8
      %s233 = scalar_lea.vmem %s4, %s232
      %p234 = pneg %p158
      %p235 = pneg %p155
      %p236 = scmp.lt.s32.totalorder %s17, 1
      %s237 = scalar_select %p236, %s17, 1
      %s238 = smul.addr %s237, 8
      %s239 = scalar_lea.vmem %s5, %s238
      %s240 = smul.u32 2, %s17
      %p241 = scmp.lt.s32.totalorder %s240, 3
      %s242 = scalar_select %p241, %s240, 3
      %s243 = smul.addr %s242, 4
      %s244 = smul.addr %s243, 4
      %s245 = scalar_lea.vmem %s0, %s244
      %s246 = smul.u32 2, %s17
      %p247 = scmp.lt.s32.totalorder %s17, 1
      %s248 = scalar_select %p247, %s17, 1
      %s249 = smul.addr %s248, 3
      %s250 = smul.addr %s249, 8
      %s251 = scalar_lea.vmem %s1, %s250
      %p252 = scmp.lt.s32.totalorder %s17, 1
      %s253 = scalar_select %p252, %s17, 1
      %s254 = smul.addr %s253, 3
      %s255 = smul.addr %s254, 8
      %s256 = scalar_lea.vmem %s4, %s255
      %p257 = scmp.lt.s32.totalorder %s17, 1
      %s258 = scalar_select %p257, %s17, 1
      %s259 = smul.addr %s258, 8
      %s260 = scalar_lea.vmem %s5, %s259
      %v261 = vld [vmem:[%s245] sm:$0xff]
      %v262 = vld [vmem:[%s245 + $0x8] sm:$0xff]
      %v263 = vld [vmem:[%s245 + $0x10] sm:$0xff]
      %v264 = vld [vmem:[%s245 + $0x18] sm:$0xff]
      %v265 = vld [vmem:[%s2] sm:$0xff]
      %v266 = vld [vmem:[%s2 + $0x8] sm:$0xff]
      %v267 = vld [vmem:[%s2 + $0x10] sm:$0xff]
      %v268 = vld [vmem:[%s2 + $0x18] sm:$0xff]
      %v269 = vld [vmem:[%s2 + $0x20] sm:$0xff]
      %v270 = vld [vmem:[%s2 + $0x28] sm:$0xff]
      %v271 = vld [vmem:[%s2 + $0x30] sm:$0xff]
      %v272 = vld [vmem:[%s2 + $0x38] sm:$0xff]
      %v273 = vld [vmem:[%s2 + $0x40] sm:$0xff]
      %v274 = vld [vmem:[%s2 + $0x48] sm:$0xff]
      %v275 = vld [vmem:[%s2 + $0x50] sm:$0xff]
      %v276 = vld [vmem:[%s2 + $0x58] sm:$0xff]
      %v277 = vld [vmem:[%s2 + $0x60] sm:$0xff]
      %v278 = vld [vmem:[%s2 + $0x68] sm:$0xff]
      %v279 = vld [vmem:[%s2 + $0x70] sm:$0xff]
      %v280 = vld [vmem:[%s2 + $0x78] sm:$0xff]
      %v281 = vld [vmem:[%s2 + $0x80] sm:$0xff]
      %v282 = vld [vmem:[%s2 + $0x88] sm:$0xff]
      %v283 = vld [vmem:[%s2 + $0x90] sm:$0xff]
      %v284 = vld [vmem:[%s2 + $0x98] sm:$0xff]
      %v285 = vld [vmem:[%s2 + $0xa0] sm:$0xff]
      %v286 = vld [vmem:[%s2 + $0xa8] sm:$0xff]
      %v287 = vld [vmem:[%s2 + $0xb0] sm:$0xff]
      %v288 = vld [vmem:[%s2 + $0xb8] sm:$0xff]
      %v289 = vld [vmem:[%s2 + $0xc0] sm:$0xff]
      %v290 = vld [vmem:[%s2 + $0xc8] sm:$0xff]
      %v291 = vld [vmem:[%s2 + $0xd0] sm:$0xff]
      %v292 = vld [vmem:[%s2 + $0xd8] sm:$0xff]
      %v293 = vld [vmem:[%s2 + $0xe0] sm:$0xff]
      %v294 = vld [vmem:[%s2 + $0xe8] sm:$0xff]
      %v295 = vld [vmem:[%s2 + $0xf0] sm:$0xff]
      %v296 = vld [vmem:[%s2 + $0xf8] sm:$0xff]
      %v297 = vld [vmem:[%s2 + $0x100] sm:$0xff]
      %v298 = vld [vmem:[%s2 + $0x108] sm:$0xff]
      %v299 = vld [vmem:[%s2 + $0x110] sm:$0xff]
      %v300 = vld [vmem:[%s2 + $0x118] sm:$0xff]
      %v301 = vld [vmem:[%s2 + $0x120] sm:$0xff]
      %v302 = vld [vmem:[%s2 + $0x128] sm:$0xff]
      %v303 = vld [vmem:[%s2 + $0x130] sm:$0xff]
      %v304 = vld [vmem:[%s2 + $0x138] sm:$0xff]
      %v305 = vld [vmem:[%s2 + $0x140] sm:$0xff]
      %v306 = vld [vmem:[%s2 + $0x148] sm:$0xff]
      %v307 = vld [vmem:[%s2 + $0x150] sm:$0xff]
      %v308 = vld [vmem:[%s2 + $0x158] sm:$0xff]
      %v309 = vld [vmem:[%s2 + $0x160] sm:$0xff]
      %v310 = vld [vmem:[%s2 + $0x168] sm:$0xff]
      %v311 = vld [vmem:[%s2 + $0x170] sm:$0xff]
      %v312 = vld [vmem:[%s2 + $0x178] sm:$0xff]
      %v313 = vld [vmem:[%s2 + $0x180] sm:$0xff]
      %v314 = vld [vmem:[%s2 + $0x188] sm:$0xff]
      %v315 = vld [vmem:[%s2 + $0x190] sm:$0xff]
      %v316 = vld [vmem:[%s2 + $0x198] sm:$0xff]
      %v317 = vld [vmem:[%s2 + $0x1a0] sm:$0xff]
      %v318 = vld [vmem:[%s2 + $0x1a8] sm:$0xff]
      %v319 = vld [vmem:[%s2 + $0x1b0] sm:$0xff]
      %v320 = vld [vmem:[%s2 + $0x1b8] sm:$0xff]
      %v321 = vld [vmem:[%s2 + $0x1c0] sm:$0xff]
      %v322 = vld [vmem:[%s2 + $0x1c8] sm:$0xff]
      %v323 = vld [vmem:[%s2 + $0x1d0] sm:$0xff]
      %v324 = vld [vmem:[%s2 + $0x1d8] sm:$0xff]
      %v325 = vld [vmem:[%s2 + $0x1e0] sm:$0xff]
      %v326 = vld [vmem:[%s2 + $0x1e8] sm:$0xff]
      %v327 = vld [vmem:[%s2 + $0x1f0] sm:$0xff]
      %v328 = vld [vmem:[%s2 + $0x1f8] sm:$0xff]
      %v329 = vld [vmem:[%s2 + $0x200] sm:$0xff]
      %v330 = vld [vmem:[%s2 + $0x208] sm:$0xff]
      %v331 = vld [vmem:[%s2 + $0x210] sm:$0xff]
      %v332 = vld [vmem:[%s2 + $0x218] sm:$0xff]
      %v333 = vld [vmem:[%s2 + $0x220] sm:$0xff]
      %v334 = vld [vmem:[%s2 + $0x228] sm:$0xff]
      %v335 = vld [vmem:[%s2 + $0x230] sm:$0xff]
      %v336 = vld [vmem:[%s2 + $0x238] sm:$0xff]
      %v337 = vld [vmem:[%s2 + $0x240] sm:$0xff]
      %v338 = vld [vmem:[%s2 + $0x248] sm:$0xff]
      %v339 = vld [vmem:[%s2 + $0x250] sm:$0xff]
      %v340 = vld [vmem:[%s2 + $0x258] sm:$0xff]
      %v341 = vld [vmem:[%s2 + $0x260] sm:$0xff]
      %v342 = vld [vmem:[%s2 + $0x268] sm:$0xff]
      %v343 = vld [vmem:[%s2 + $0x270] sm:$0xff]
      %v344 = vld [vmem:[%s2 + $0x278] sm:$0xff]
      %v345 = vld [vmem:[%s2 + $0x280] sm:$0xff]
      %v346 = vld [vmem:[%s2 + $0x288] sm:$0xff]
      %v347 = vld [vmem:[%s2 + $0x290] sm:$0xff]
      %v348 = vld [vmem:[%s2 + $0x298] sm:$0xff]
      %v349 = vld [vmem:[%s2 + $0x2a0] sm:$0xff]
      %v350 = vld [vmem:[%s2 + $0x2a8] sm:$0xff]
      %v351 = vld [vmem:[%s2 + $0x2b0] sm:$0xff]
      %v352 = vld [vmem:[%s2 + $0x2b8] sm:$0xff]
      %v353 = vld [vmem:[%s2 + $0x2c0] sm:$0xff]
      %v354 = vld [vmem:[%s2 + $0x2c8] sm:$0xff]
      %v355 = vld [vmem:[%s2 + $0x2d0] sm:$0xff]
      %v356 = vld [vmem:[%s2 + $0x2d8] sm:$0xff]
      %v357 = vld [vmem:[%s2 + $0x2e0] sm:$0xff]
      %v358 = vld [vmem:[%s2 + $0x2e8] sm:$0xff]
      %v359 = vld [vmem:[%s2 + $0x2f0] sm:$0xff]
      %v360 = vld [vmem:[%s2 + $0x2f8] sm:$0xff]
      %v361 = vld [vmem:[%s2 + $0x300] sm:$0xff]
      %v362 = vld [vmem:[%s2 + $0x308] sm:$0xff]
      %v363 = vld [vmem:[%s2 + $0x310] sm:$0xff]
      %v364 = vld [vmem:[%s2 + $0x318] sm:$0xff]
      %v365 = vld [vmem:[%s2 + $0x320] sm:$0xff]
      %v366 = vld [vmem:[%s2 + $0x328] sm:$0xff]
      %v367 = vld [vmem:[%s2 + $0x330] sm:$0xff]
      %v368 = vld [vmem:[%s2 + $0x338] sm:$0xff]
      %v369 = vld [vmem:[%s2 + $0x340] sm:$0xff]
      %v370 = vld [vmem:[%s2 + $0x348] sm:$0xff]
      %v371 = vld [vmem:[%s2 + $0x350] sm:$0xff]
      %v372 = vld [vmem:[%s2 + $0x358] sm:$0xff]
      %v373 = vld [vmem:[%s2 + $0x360] sm:$0xff]
      %v374 = vld [vmem:[%s2 + $0x368] sm:$0xff]
      %v375 = vld [vmem:[%s2 + $0x370] sm:$0xff]
      %v376 = vld [vmem:[%s2 + $0x378] sm:$0xff]
      %v377 = vld [vmem:[%s2 + $0x380] sm:$0xff]
      %v378 = vld [vmem:[%s2 + $0x388] sm:$0xff]
      %v379 = vld [vmem:[%s2 + $0x390] sm:$0xff]
      %v380 = vld [vmem:[%s2 + $0x398] sm:$0xff]
      %v381 = vld [vmem:[%s2 + $0x3a0] sm:$0xff]
      %v382 = vld [vmem:[%s2 + $0x3a8] sm:$0xff]
      %v383 = vld [vmem:[%s2 + $0x3b0] sm:$0xff]
      %v384 = vld [vmem:[%s2 + $0x3b8] sm:$0xff]
      %v385 = vld [vmem:[%s2 + $0x3c0] sm:$0xff]
      %v386 = vld [vmem:[%s2 + $0x3c8] sm:$0xff]
      %v387 = vld [vmem:[%s2 + $0x3d0] sm:$0xff]
      %v388 = vld [vmem:[%s2 + $0x3d8] sm:$0xff]
      %v389 = vld [vmem:[%s2 + $0x3e0] sm:$0xff]
      %v390 = vld [vmem:[%s2 + $0x3e8] sm:$0xff]
      %v391 = vld [vmem:[%s2 + $0x3f0] sm:$0xff]
      %v392 = vld [vmem:[%s2 + $0x3f8] sm:$0xff]
      %v393 = vld [vmem:[%s2 + $0x400] sm:$0xff]
      %v394 = vld [vmem:[%s2 + $0x408] sm:$0xff]
      %v395 = vld [vmem:[%s2 + $0x410] sm:$0xff]
      %v396 = vld [vmem:[%s2 + $0x418] sm:$0xff]
      %v397 = vld [vmem:[%s2 + $0x420] sm:$0xff]
      %v398 = vld [vmem:[%s2 + $0x428] sm:$0xff]
      %v399 = vld [vmem:[%s2 + $0x430] sm:$0xff]
      %v400 = vld [vmem:[%s2 + $0x438] sm:$0xff]
      %v401 = vld [vmem:[%s2 + $0x440] sm:$0xff]
      %v402 = vld [vmem:[%s2 + $0x448] sm:$0xff]
      %v403 = vld [vmem:[%s2 + $0x450] sm:$0xff]
      %v404 = vld [vmem:[%s2 + $0x458] sm:$0xff]
      %v405 = vld [vmem:[%s2 + $0x460] sm:$0xff]
      %v406 = vld [vmem:[%s2 + $0x468] sm:$0xff]
      %v407 = vld [vmem:[%s2 + $0x470] sm:$0xff]
      %v408 = vld [vmem:[%s2 + $0x478] sm:$0xff]
      %v409 = vld [vmem:[%s2 + $0x480] sm:$0xff]
      %v410 = vld [vmem:[%s2 + $0x488] sm:$0xff]
      %v411 = vld [vmem:[%s2 + $0x490] sm:$0xff]
      %v412 = vld [vmem:[%s2 + $0x498] sm:$0xff]
      %v413 = vld [vmem:[%s2 + $0x4a0] sm:$0xff]
      %v414 = vld [vmem:[%s2 + $0x4a8] sm:$0xff]
      %v415 = vld [vmem:[%s2 + $0x4b0] sm:$0xff]
      %v416 = vld [vmem:[%s2 + $0x4b8] sm:$0xff]
      %v417 = vld [vmem:[%s2 + $0x4c0] sm:$0xff]
      %v418 = vld [vmem:[%s2 + $0x4c8] sm:$0xff]
      %v419 = vld [vmem:[%s2 + $0x4d0] sm:$0xff]
      %v420 = vld [vmem:[%s2 + $0x4d8] sm:$0xff]
      %v421 = vld [vmem:[%s2 + $0x4e0] sm:$0xff]
      %v422 = vld [vmem:[%s2 + $0x4e8] sm:$0xff]
      %v423 = vld [vmem:[%s2 + $0x4f0] sm:$0xff]
      %v424 = vld [vmem:[%s2 + $0x4f8] sm:$0xff]
      %v425 = vld [vmem:[%s2 + $0x500] sm:$0xff]
      %v426 = vld [vmem:[%s2 + $0x508] sm:$0xff]
      %v427 = vld [vmem:[%s2 + $0x510] sm:$0xff]
      %v428 = vld [vmem:[%s2 + $0x518] sm:$0xff]
      %v429 = vld [vmem:[%s2 + $0x520] sm:$0xff]
      %v430 = vld [vmem:[%s2 + $0x528] sm:$0xff]
      %v431 = vld [vmem:[%s2 + $0x530] sm:$0xff]
      %v432 = vld [vmem:[%s2 + $0x538] sm:$0xff]
      %v433 = vld [vmem:[%s2 + $0x540] sm:$0xff]
      %v434 = vld [vmem:[%s2 + $0x548] sm:$0xff]
      %v435 = vld [vmem:[%s2 + $0x550] sm:$0xff]
      %v436 = vld [vmem:[%s2 + $0x558] sm:$0xff]
      %v437 = vld [vmem:[%s2 + $0x560] sm:$0xff]
      %v438 = vld [vmem:[%s2 + $0x568] sm:$0xff]
      %v439 = vld [vmem:[%s2 + $0x570] sm:$0xff]
      %v440 = vld [vmem:[%s2 + $0x578] sm:$0xff]
      %v441 = vld [vmem:[%s2 + $0x580] sm:$0xff]
      %v442 = vld [vmem:[%s2 + $0x588] sm:$0xff]
      %v443 = vld [vmem:[%s2 + $0x590] sm:$0xff]
      %v444 = vld [vmem:[%s2 + $0x598] sm:$0xff]
      %v445 = vld [vmem:[%s2 + $0x5a0] sm:$0xff]
      %v446 = vld [vmem:[%s2 + $0x5a8] sm:$0xff]
      %v447 = vld [vmem:[%s2 + $0x5b0] sm:$0xff]
      %v448 = vld [vmem:[%s2 + $0x5b8] sm:$0xff]
      %v449 = vld [vmem:[%s2 + $0x5c0] sm:$0xff]
      %v450 = vld [vmem:[%s2 + $0x5c8] sm:$0xff]
      %v451 = vld [vmem:[%s2 + $0x5d0] sm:$0xff]
      %v452 = vld [vmem:[%s2 + $0x5d8] sm:$0xff]
      %v453 = vld [vmem:[%s2 + $0x5e0] sm:$0xff]
      %v454 = vld [vmem:[%s2 + $0x5e8] sm:$0xff]
      %v455 = vld [vmem:[%s2 + $0x5f0] sm:$0xff]
      %v456 = vld [vmem:[%s2 + $0x5f8] sm:$0xff]
      %v461 = vunpack.c.l.b16 %v261
      %v462 = vunpack.c.h.b16 %v261
      %v463 = vunpack.c.l.b16 %v262
      %v464 = vunpack.c.h.b16 %v262
      %v465 = vunpack.c.l.b16 %v263
      %v466 = vunpack.c.h.b16 %v263
      %v467 = vunpack.c.l.b16 %v264
      %v468 = vunpack.c.h.b16 %v264
      %v469 = vpack.c.b16 %v465, %v461
      %v470 = vpack.c.b16 %v466, %v462
      %v471 = vpack.c.b16 %v467, %v463
      %v472 = vpack.c.b16 %v468, %v464
      %v669 = vunpack.c.l.b16 %v265
      %v670 = vunpack.c.h.b16 %v265
      %v671 = vunpack.c.l.b16 %v266
      %v672 = vunpack.c.h.b16 %v266
      %v673 = vunpack.c.l.b16 %v267
      %v674 = vunpack.c.h.b16 %v267
      %v675 = vunpack.c.l.b16 %v268
      %v676 = vunpack.c.h.b16 %v268
      %v677 = vunpack.c.l.b16 %v269
      %v678 = vunpack.c.h.b16 %v269
      %v679 = vunpack.c.l.b16 %v270
      %v680 = vunpack.c.h.b16 %v270
      %v681 = vunpack.c.l.b16 %v271
      %v682 = vunpack.c.h.b16 %v271
      %v683 = vunpack.c.l.b16 %v272
      %v684 = vunpack.c.h.b16 %v272
      %v685 = vunpack.c.l.b16 %v273
      %v686 = vunpack.c.h.b16 %v273
      %v687 = vunpack.c.l.b16 %v274
      %v688 = vunpack.c.h.b16 %v274
      %v689 = vunpack.c.l.b16 %v275
      %v690 = vunpack.c.h.b16 %v275
      %v691 = vunpack.c.l.b16 %v276
      %v692 = vunpack.c.h.b16 %v276
      %v693 = vunpack.c.l.b16 %v277
      %v694 = vunpack.c.h.b16 %v277
      %v695 = vunpack.c.l.b16 %v278
      %v696 = vunpack.c.h.b16 %v278
      %v697 = vunpack.c.l.b16 %v279
      %v698 = vunpack.c.h.b16 %v279
      %v699 = vunpack.c.l.b16 %v280
      %v700 = vunpack.c.h.b16 %v280
      %v701 = vunpack.c.l.b16 %v281
      %v702 = vunpack.c.h.b16 %v281
      %v703 = vunpack.c.l.b16 %v282
      %v704 = vunpack.c.h.b16 %v282
      %v705 = vunpack.c.l.b16 %v283
      %v706 = vunpack.c.h.b16 %v283
      %v707 = vunpack.c.l.b16 %v284
      %v708 = vunpack.c.h.b16 %v284
      %v709 = vunpack.c.l.b16 %v285
      %v710 = vunpack.c.h.b16 %v285
      %v711 = vunpack.c.l.b16 %v286
      %v712 = vunpack.c.h.b16 %v286
      %v713 = vunpack.c.l.b16 %v287
      %v714 = vunpack.c.h.b16 %v287
      %v715 = vunpack.c.l.b16 %v288
      %v716 = vunpack.c.h.b16 %v288
      %v717 = vunpack.c.l.b16 %v289
      %v718 = vunpack.c.h.b16 %v289
      %v719 = vunpack.c.l.b16 %v290
      %v720 = vunpack.c.h.b16 %v290
      %v721 = vunpack.c.l.b16 %v291
      %v722 = vunpack.c.h.b16 %v291
      %v723 = vunpack.c.l.b16 %v292
      %v724 = vunpack.c.h.b16 %v292
      %v725 = vunpack.c.l.b16 %v293
      %v726 = vunpack.c.h.b16 %v293
      %v727 = vunpack.c.l.b16 %v294
      %v728 = vunpack.c.h.b16 %v294
      %v729 = vunpack.c.l.b16 %v295
      %v730 = vunpack.c.h.b16 %v295
      %v731 = vunpack.c.l.b16 %v296
      %v732 = vunpack.c.h.b16 %v296
      %v733 = vunpack.c.l.b16 %v297
      %v734 = vunpack.c.h.b16 %v297
      %v735 = vunpack.c.l.b16 %v298
      %v736 = vunpack.c.h.b16 %v298
      %v737 = vunpack.c.l.b16 %v299
      %v738 = vunpack.c.h.b16 %v299
      %v739 = vunpack.c.l.b16 %v300
      %v740 = vunpack.c.h.b16 %v300
      %v741 = vunpack.c.l.b16 %v301
      %v742 = vunpack.c.h.b16 %v301
      %v743 = vunpack.c.l.b16 %v302
      %v744 = vunpack.c.h.b16 %v302
      %v745 = vunpack.c.l.b16 %v303
      %v746 = vunpack.c.h.b16 %v303
      %v747 = vunpack.c.l.b16 %v304
      %v748 = vunpack.c.h.b16 %v304
      %v749 = vunpack.c.l.b16 %v305
      %v750 = vunpack.c.h.b16 %v305
      %v751 = vunpack.c.l.b16 %v306
      %v752 = vunpack.c.h.b16 %v306
      %v753 = vunpack.c.l.b16 %v307
      %v754 = vunpack.c.h.b16 %v307
      %v755 = vunpack.c.l.b16 %v308
      %v756 = vunpack.c.h.b16 %v308
      %v757 = vunpack.c.l.b16 %v309
      %v758 = vunpack.c.h.b16 %v309
      %v759 = vunpack.c.l.b16 %v310
      %v760 = vunpack.c.h.b16 %v310
      %v761 = vunpack.c.l.b16 %v311
      %v762 = vunpack.c.h.b16 %v311
      %v763 = vunpack.c.l.b16 %v312
      %v764 = vunpack.c.h.b16 %v312
      %v765 = vunpack.c.l.b16 %v313
      %v766 = vunpack.c.h.b16 %v313
      %v767 = vunpack.c.l.b16 %v314
      %v768 = vunpack.c.h.b16 %v314
      %v769 = vunpack.c.l.b16 %v315
      %v770 = vunpack.c.h.b16 %v315
      %v771 = vunpack.c.l.b16 %v316
      %v772 = vunpack.c.h.b16 %v316
      %v773 = vunpack.c.l.b16 %v317
      %v774 = vunpack.c.h.b16 %v317
      %v775 = vunpack.c.l.b16 %v318
      %v776 = vunpack.c.h.b16 %v318
      %v777 = vunpack.c.l.b16 %v319
      %v778 = vunpack.c.h.b16 %v319
      %v779 = vunpack.c.l.b16 %v320
      %v780 = vunpack.c.h.b16 %v320
      %v781 = vunpack.c.l.b16 %v321
      %v782 = vunpack.c.h.b16 %v321
      %v783 = vunpack.c.l.b16 %v322
      %v784 = vunpack.c.h.b16 %v322
      %v785 = vunpack.c.l.b16 %v323
      %v786 = vunpack.c.h.b16 %v323
      %v787 = vunpack.c.l.b16 %v324
      %v788 = vunpack.c.h.b16 %v324
      %v789 = vunpack.c.l.b16 %v325
      %v790 = vunpack.c.h.b16 %v325
      %v791 = vunpack.c.l.b16 %v326
      %v792 = vunpack.c.h.b16 %v326
      %v793 = vunpack.c.l.b16 %v327
      %v794 = vunpack.c.h.b16 %v327
      %v795 = vunpack.c.l.b16 %v328
      %v796 = vunpack.c.h.b16 %v328
      %v797 = vunpack.c.l.b16 %v329
      %v798 = vunpack.c.h.b16 %v329
      %v799 = vunpack.c.l.b16 %v330
      %v800 = vunpack.c.h.b16 %v330
      %v801 = vunpack.c.l.b16 %v331
      %v802 = vunpack.c.h.b16 %v331
      %v803 = vunpack.c.l.b16 %v332
      %v804 = vunpack.c.h.b16 %v332
      %v805 = vunpack.c.l.b16 %v333
      %v806 = vunpack.c.h.b16 %v333
      %v807 = vunpack.c.l.b16 %v334
      %v808 = vunpack.c.h.b16 %v334
      %v809 = vunpack.c.l.b16 %v335
      %v810 = vunpack.c.h.b16 %v335
      %v811 = vunpack.c.l.b16 %v336
      %v812 = vunpack.c.h.b16 %v336
      %v813 = vunpack.c.l.b16 %v337
      %v814 = vunpack.c.h.b16 %v337
      %v815 = vunpack.c.l.b16 %v338
      %v816 = vunpack.c.h.b16 %v338
      %v817 = vunpack.c.l.b16 %v339
      %v818 = vunpack.c.h.b16 %v339
      %v819 = vunpack.c.l.b16 %v340
      %v820 = vunpack.c.h.b16 %v340
      %v821 = vunpack.c.l.b16 %v341
      %v822 = vunpack.c.h.b16 %v341
      %v823 = vunpack.c.l.b16 %v342
      %v824 = vunpack.c.h.b16 %v342
      %v825 = vunpack.c.l.b16 %v343
      %v826 = vunpack.c.h.b16 %v343
      %v827 = vunpack.c.l.b16 %v344
      %v828 = vunpack.c.h.b16 %v344
      %v829 = vunpack.c.l.b16 %v345
      %v830 = vunpack.c.h.b16 %v345
      %v831 = vunpack.c.l.b16 %v346
      %v832 = vunpack.c.h.b16 %v346
      %v833 = vunpack.c.l.b16 %v347
      %v834 = vunpack.c.h.b16 %v347
      %v835 = vunpack.c.l.b16 %v348
      %v836 = vunpack.c.h.b16 %v348
      %v837 = vunpack.c.l.b16 %v349
      %v838 = vunpack.c.h.b16 %v349
      %v839 = vunpack.c.l.b16 %v350
      %v840 = vunpack.c.h.b16 %v350
      %v841 = vunpack.c.l.b16 %v351
      %v842 = vunpack.c.h.b16 %v351
      %v843 = vunpack.c.l.b16 %v352
      %v844 = vunpack.c.h.b16 %v352
      %v845 = vunpack.c.l.b16 %v353
      %v846 = vunpack.c.h.b16 %v353
      %v847 = vunpack.c.l.b16 %v354
      %v848 = vunpack.c.h.b16 %v354
      %v849 = vunpack.c.l.b16 %v355
      %v850 = vunpack.c.h.b16 %v355
      %v851 = vunpack.c.l.b16 %v356
      %v852 = vunpack.c.h.b16 %v356
      %v853 = vunpack.c.l.b16 %v357
      %v854 = vunpack.c.h.b16 %v357
      %v855 = vunpack.c.l.b16 %v358
      %v856 = vunpack.c.h.b16 %v358
      %v857 = vunpack.c.l.b16 %v359
      %v858 = vunpack.c.h.b16 %v359
      %v859 = vunpack.c.l.b16 %v360
      %v860 = vunpack.c.h.b16 %v360
      %v861 = vunpack.c.l.b16 %v361
      %v862 = vunpack.c.h.b16 %v361
      %v863 = vunpack.c.l.b16 %v362
      %v864 = vunpack.c.h.b16 %v362
      %v865 = vunpack.c.l.b16 %v363
      %v866 = vunpack.c.h.b16 %v363
      %v867 = vunpack.c.l.b16 %v364
      %v868 = vunpack.c.h.b16 %v364
      %v869 = vunpack.c.l.b16 %v365
      %v870 = vunpack.c.h.b16 %v365
      %v871 = vunpack.c.l.b16 %v366
      %v872 = vunpack.c.h.b16 %v366
      %v873 = vunpack.c.l.b16 %v367
      %v874 = vunpack.c.h.b16 %v367
      %v875 = vunpack.c.l.b16 %v368
      %v876 = vunpack.c.h.b16 %v368
      %v877 = vunpack.c.l.b16 %v369
      %v878 = vunpack.c.h.b16 %v369
      %v879 = vunpack.c.l.b16 %v370
      %v880 = vunpack.c.h.b16 %v370
      %v881 = vunpack.c.l.b16 %v371
      %v882 = vunpack.c.h.b16 %v371
      %v883 = vunpack.c.l.b16 %v372
      %v884 = vunpack.c.h.b16 %v372
      %v885 = vunpack.c.l.b16 %v373
      %v886 = vunpack.c.h.b16 %v373
      %v887 = vunpack.c.l.b16 %v374
      %v888 = vunpack.c.h.b16 %v374
      %v889 = vunpack.c.l.b16 %v375
      %v890 = vunpack.c.h.b16 %v375
      %v891 = vunpack.c.l.b16 %v376
      %v892 = vunpack.c.h.b16 %v376
      %v893 = vunpack.c.l.b16 %v377
      %v894 = vunpack.c.h.b16 %v377
      %v895 = vunpack.c.l.b16 %v378
      %v896 = vunpack.c.h.b16 %v378
      %v897 = vunpack.c.l.b16 %v379
      %v898 = vunpack.c.h.b16 %v379
      %v899 = vunpack.c.l.b16 %v380
      %v900 = vunpack.c.h.b16 %v380
      %v901 = vunpack.c.l.b16 %v381
      %v902 = vunpack.c.h.b16 %v381
      %v903 = vunpack.c.l.b16 %v382
      %v904 = vunpack.c.h.b16 %v382
      %v905 = vunpack.c.l.b16 %v383
      %v906 = vunpack.c.h.b16 %v383
      %v907 = vunpack.c.l.b16 %v384
      %v908 = vunpack.c.h.b16 %v384
      %v909 = vunpack.c.l.b16 %v385
      %v910 = vunpack.c.h.b16 %v385
      %v911 = vunpack.c.l.b16 %v386
      %v912 = vunpack.c.h.b16 %v386
      %v913 = vunpack.c.l.b16 %v387
      %v914 = vunpack.c.h.b16 %v387
      %v915 = vunpack.c.l.b16 %v388
      %v916 = vunpack.c.h.b16 %v388
      %v917 = vunpack.c.l.b16 %v389
      %v918 = vunpack.c.h.b16 %v389
      %v919 = vunpack.c.l.b16 %v390
      %v920 = vunpack.c.h.b16 %v390
      %v921 = vunpack.c.l.b16 %v391
      %v922 = vunpack.c.h.b16 %v391
      %v923 = vunpack.c.l.b16 %v392
      %v924 = vunpack.c.h.b16 %v392
      %v925 = vunpack.c.l.b16 %v393
      %v926 = vunpack.c.h.b16 %v393
      %v927 = vunpack.c.l.b16 %v394
      %v928 = vunpack.c.h.b16 %v394
      %v929 = vunpack.c.l.b16 %v395
      %v930 = vunpack.c.h.b16 %v395
      %v931 = vunpack.c.l.b16 %v396
      %v932 = vunpack.c.h.b16 %v396
      %v933 = vunpack.c.l.b16 %v397
      %v934 = vunpack.c.h.b16 %v397
      %v935 = vunpack.c.l.b16 %v398
      %v936 = vunpack.c.h.b16 %v398
      %v937 = vunpack.c.l.b16 %v399
      %v938 = vunpack.c.h.b16 %v399
      %v939 = vunpack.c.l.b16 %v400
      %v940 = vunpack.c.h.b16 %v400
      %v941 = vunpack.c.l.b16 %v401
      %v942 = vunpack.c.h.b16 %v401
      %v943 = vunpack.c.l.b16 %v402
      %v944 = vunpack.c.h.b16 %v402
      %v945 = vunpack.c.l.b16 %v403
      %v946 = vunpack.c.h.b16 %v403
      %v947 = vunpack.c.l.b16 %v404
      %v948 = vunpack.c.h.b16 %v404
      %v949 = vunpack.c.l.b16 %v405
      %v950 = vunpack.c.h.b16 %v405
      %v951 = vunpack.c.l.b16 %v406
      %v952 = vunpack.c.h.b16 %v406
      %v953 = vunpack.c.l.b16 %v407
      %v954 = vunpack.c.h.b16 %v407
      %v955 = vunpack.c.l.b16 %v408
      %v956 = vunpack.c.h.b16 %v408
      %v957 = vunpack.c.l.b16 %v409
      %v958 = vunpack.c.h.b16 %v409
      %v959 = vunpack.c.l.b16 %v410
      %v960 = vunpack.c.h.b16 %v410
      %v961 = vunpack.c.l.b16 %v411
      %v962 = vunpack.c.h.b16 %v411
      %v963 = vunpack.c.l.b16 %v412
      %v964 = vunpack.c.h.b16 %v412
      %v965 = vunpack.c.l.b16 %v413
      %v966 = vunpack.c.h.b16 %v413
      %v967 = vunpack.c.l.b16 %v414
      %v968 = vunpack.c.h.b16 %v414
      %v969 = vunpack.c.l.b16 %v415
      %v970 = vunpack.c.h.b16 %v415
      %v971 = vunpack.c.l.b16 %v416
      %v972 = vunpack.c.h.b16 %v416
      %v973 = vunpack.c.l.b16 %v417
      %v974 = vunpack.c.h.b16 %v417
      %v975 = vunpack.c.l.b16 %v418
      %v976 = vunpack.c.h.b16 %v418
      %v977 = vunpack.c.l.b16 %v419
      %v978 = vunpack.c.h.b16 %v419
      %v979 = vunpack.c.l.b16 %v420
      %v980 = vunpack.c.h.b16 %v420
      %v981 = vunpack.c.l.b16 %v421
      %v982 = vunpack.c.h.b16 %v421
      %v983 = vunpack.c.l.b16 %v422
      %v984 = vunpack.c.h.b16 %v422
      %v985 = vunpack.c.l.b16 %v423
      %v986 = vunpack.c.h.b16 %v423
      %v987 = vunpack.c.l.b16 %v424
      %v988 = vunpack.c.h.b16 %v424
      %v989 = vunpack.c.l.b16 %v425
      %v990 = vunpack.c.h.b16 %v425
      %v991 = vunpack.c.l.b16 %v426
      %v992 = vunpack.c.h.b16 %v426
      %v993 = vunpack.c.l.b16 %v427
      %v994 = vunpack.c.h.b16 %v427
      %v995 = vunpack.c.l.b16 %v428
      %v996 = vunpack.c.h.b16 %v428
      %v997 = vunpack.c.l.b16 %v429
      %v998 = vunpack.c.h.b16 %v429
      %v999 = vunpack.c.l.b16 %v430
      %v1000 = vunpack.c.h.b16 %v430
      %v1001 = vunpack.c.l.b16 %v431
      %v1002 = vunpack.c.h.b16 %v431
      %v1003 = vunpack.c.l.b16 %v432
      %v1004 = vunpack.c.h.b16 %v432
      %v1005 = vunpack.c.l.b16 %v433
      %v1006 = vunpack.c.h.b16 %v433
      %v1007 = vunpack.c.l.b16 %v434
      %v1008 = vunpack.c.h.b16 %v434
      %v1009 = vunpack.c.l.b16 %v435
      %v1010 = vunpack.c.h.b16 %v435
      %v1011 = vunpack.c.l.b16 %v436
      %v1012 = vunpack.c.h.b16 %v436
      %v1013 = vunpack.c.l.b16 %v437
      %v1014 = vunpack.c.h.b16 %v437
      %v1015 = vunpack.c.l.b16 %v438
      %v1016 = vunpack.c.h.b16 %v438
      %v1017 = vunpack.c.l.b16 %v439
      %v1018 = vunpack.c.h.b16 %v439
      %v1019 = vunpack.c.l.b16 %v440
      %v1020 = vunpack.c.h.b16 %v440
      %v1021 = vunpack.c.l.b16 %v441
      %v1022 = vunpack.c.h.b16 %v441
      %v1023 = vunpack.c.l.b16 %v442
      %v1024 = vunpack.c.h.b16 %v442
      %v1025 = vunpack.c.l.b16 %v443
      %v1026 = vunpack.c.h.b16 %v443
      %v1027 = vunpack.c.l.b16 %v444
      %v1028 = vunpack.c.h.b16 %v444
      %v1029 = vunpack.c.l.b16 %v445
      %v1030 = vunpack.c.h.b16 %v445
      %v1031 = vunpack.c.l.b16 %v446
      %v1032 = vunpack.c.h.b16 %v446
      %v1033 = vunpack.c.l.b16 %v447
      %v1034 = vunpack.c.h.b16 %v447
      %v1035 = vunpack.c.l.b16 %v448
      %v1036 = vunpack.c.h.b16 %v448
      %v1037 = vunpack.c.l.b16 %v449
      %v1038 = vunpack.c.h.b16 %v449
      %v1039 = vunpack.c.l.b16 %v450
      %v1040 = vunpack.c.h.b16 %v450
      %v1041 = vunpack.c.l.b16 %v451
      %v1042 = vunpack.c.h.b16 %v451
      %v1043 = vunpack.c.l.b16 %v452
      %v1044 = vunpack.c.h.b16 %v452
      %v1045 = vunpack.c.l.b16 %v453
      %v1046 = vunpack.c.h.b16 %v453
      %v1047 = vunpack.c.l.b16 %v454
      %v1048 = vunpack.c.h.b16 %v454
      %v1049 = vunpack.c.l.b16 %v455
      %v1050 = vunpack.c.h.b16 %v455
      %v1051 = vunpack.c.l.b16 %v456
      %v1052 = vunpack.c.h.b16 %v456
      %v1053 = vpack.c.b16 %v675, %v669
      %v1054 = vpack.c.b16 %v676, %v670
      %v1055 = vpack.c.b16 %v677, %v671
      %v1056 = vpack.c.b16 %v678, %v672
      %v1057 = vpack.c.b16 %v679, %v673
      %v1058 = vpack.c.b16 %v680, %v674
      %v1059 = vpack.c.b16 %v687, %v681
      %v1060 = vpack.c.b16 %v688, %v682
      %v1061 = vpack.c.b16 %v689, %v683
      %v1062 = vpack.c.b16 %v690, %v684
      %v1063 = vpack.c.b16 %v691, %v685
      %v1064 = vpack.c.b16 %v692, %v686
      %v1065 = vpack.c.b16 %v699, %v693
      %v1066 = vpack.c.b16 %v700, %v694
      %v1067 = vpack.c.b16 %v701, %v695
      %v1068 = vpack.c.b16 %v702, %v696
      %v1069 = vpack.c.b16 %v703, %v697
      %v1070 = vpack.c.b16 %v704, %v698
      %v1071 = vpack.c.b16 %v711, %v705
      %v1072 = vpack.c.b16 %v712, %v706
      %v1073 = vpack.c.b16 %v713, %v707
      %v1074 = vpack.c.b16 %v714, %v708
      %v1075 = vpack.c.b16 %v715, %v709
      %v1076 = vpack.c.b16 %v716, %v710
      %v1077 = vpack.c.b16 %v723, %v717
      %v1078 = vpack.c.b16 %v724, %v718
      %v1079 = vpack.c.b16 %v725, %v719
      %v1080 = vpack.c.b16 %v726, %v720
      %v1081 = vpack.c.b16 %v727, %v721
      %v1082 = vpack.c.b16 %v728, %v722
      %v1083 = vpack.c.b16 %v735, %v729
      %v1084 = vpack.c.b16 %v736, %v730
      %v1085 = vpack.c.b16 %v737, %v731
      %v1086 = vpack.c.b16 %v738, %v732
      %v1087 = vpack.c.b16 %v739, %v733
      %v1088 = vpack.c.b16 %v740, %v734
      %v1089 = vpack.c.b16 %v747, %v741
      %v1090 = vpack.c.b16 %v748, %v742
      %v1091 = vpack.c.b16 %v749, %v743
      %v1092 = vpack.c.b16 %v750, %v744
      %v1093 = vpack.c.b16 %v751, %v745
      %v1094 = vpack.c.b16 %v752, %v746
      %v1095 = vpack.c.b16 %v759, %v753
      %v1096 = vpack.c.b16 %v760, %v754
      %v1097 = vpack.c.b16 %v761, %v755
      %v1098 = vpack.c.b16 %v762, %v756
      %v1099 = vpack.c.b16 %v763, %v757
      %v1100 = vpack.c.b16 %v764, %v758
      %v1101 = vpack.c.b16 %v771, %v765
      %v1102 = vpack.c.b16 %v772, %v766
      %v1103 = vpack.c.b16 %v773, %v767
      %v1104 = vpack.c.b16 %v774, %v768
      %v1105 = vpack.c.b16 %v775, %v769
      %v1106 = vpack.c.b16 %v776, %v770
      %v1107 = vpack.c.b16 %v783, %v777
      %v1108 = vpack.c.b16 %v784, %v778
      %v1109 = vpack.c.b16 %v785, %v779
      %v1110 = vpack.c.b16 %v786, %v780
      %v1111 = vpack.c.b16 %v787, %v781
      %v1112 = vpack.c.b16 %v788, %v782
      %v1113 = vpack.c.b16 %v795, %v789
      %v1114 = vpack.c.b16 %v796, %v790
      %v1115 = vpack.c.b16 %v797, %v791
      %v1116 = vpack.c.b16 %v798, %v792
      %v1117 = vpack.c.b16 %v799, %v793
      %v1118 = vpack.c.b16 %v800, %v794
      %v1119 = vpack.c.b16 %v807, %v801
      %v1120 = vpack.c.b16 %v808, %v802
      %v1121 = vpack.c.b16 %v809, %v803
      %v1122 = vpack.c.b16 %v810, %v804
      %v1123 = vpack.c.b16 %v811, %v805
      %v1124 = vpack.c.b16 %v812, %v806
      %v1125 = vpack.c.b16 %v819, %v813
      %v1126 = vpack.c.b16 %v820, %v814
      %v1127 = vpack.c.b16 %v821, %v815
      %v1128 = vpack.c.b16 %v822, %v816
      %v1129 = vpack.c.b16 %v823, %v817
      %v1130 = vpack.c.b16 %v824, %v818
      %v1131 = vpack.c.b16 %v831, %v825
      %v1132 = vpack.c.b16 %v832, %v826
      %v1133 = vpack.c.b16 %v833, %v827
      %v1134 = vpack.c.b16 %v834, %v828
      %v1135 = vpack.c.b16 %v835, %v829
      %v1136 = vpack.c.b16 %v836, %v830
      %v1137 = vpack.c.b16 %v843, %v837
      %v1138 = vpack.c.b16 %v844, %v838
      %v1139 = vpack.c.b16 %v845, %v839
      %v1140 = vpack.c.b16 %v846, %v840
      %v1141 = vpack.c.b16 %v847, %v841
      %v1142 = vpack.c.b16 %v848, %v842
      %v1143 = vpack.c.b16 %v855, %v849
      %v1144 = vpack.c.b16 %v856, %v850
      %v1145 = vpack.c.b16 %v857, %v851
      %v1146 = vpack.c.b16 %v858, %v852
      %v1147 = vpack.c.b16 %v859, %v853
      %v1148 = vpack.c.b16 %v860, %v854
      %v1149 = vpack.c.b16 %v867, %v861
      %v1150 = vpack.c.b16 %v868, %v862
      %v1151 = vpack.c.b16 %v869, %v863
      %v1152 = vpack.c.b16 %v870, %v864
      %v1153 = vpack.c.b16 %v871, %v865
      %v1154 = vpack.c.b16 %v872, %v866
      %v1155 = vpack.c.b16 %v879, %v873
      %v1156 = vpack.c.b16 %v880, %v874
      %v1157 = vpack.c.b16 %v881, %v875
      %v1158 = vpack.c.b16 %v882, %v876
      %v1159 = vpack.c.b16 %v883, %v877
      %v1160 = vpack.c.b16 %v884, %v878
      %v1161 = vpack.c.b16 %v891, %v885
      %v1162 = vpack.c.b16 %v892, %v886
      %v1163 = vpack.c.b16 %v893, %v887
      %v1164 = vpack.c.b16 %v894, %v888
      %v1165 = vpack.c.b16 %v895, %v889
      %v1166 = vpack.c.b16 %v896, %v890
      %v1167 = vpack.c.b16 %v903, %v897
      %v1168 = vpack.c.b16 %v904, %v898
      %v1169 = vpack.c.b16 %v905, %v899
      %v1170 = vpack.c.b16 %v906, %v900
      %v1171 = vpack.c.b16 %v907, %v901
      %v1172 = vpack.c.b16 %v908, %v902
      %v1173 = vpack.c.b16 %v915, %v909
      %v1174 = vpack.c.b16 %v916, %v910
      %v1175 = vpack.c.b16 %v917, %v911
      %v1176 = vpack.c.b16 %v918, %v912
      %v1177 = vpack.c.b16 %v919, %v913
      %v1178 = vpack.c.b16 %v920, %v914
      %v1179 = vpack.c.b16 %v927, %v921
      %v1180 = vpack.c.b16 %v928, %v922
      %v1181 = vpack.c.b16 %v929, %v923
      %v1182 = vpack.c.b16 %v930, %v924
      %v1183 = vpack.c.b16 %v931, %v925
      %v1184 = vpack.c.b16 %v932, %v926
      %v1185 = vpack.c.b16 %v939, %v933
      %v1186 = vpack.c.b16 %v940, %v934
      %v1187 = vpack.c.b16 %v941, %v935
      %v1188 = vpack.c.b16 %v942, %v936
      %v1189 = vpack.c.b16 %v943, %v937
      %v1190 = vpack.c.b16 %v944, %v938
      %v1191 = vpack.c.b16 %v951, %v945
      %v1192 = vpack.c.b16 %v952, %v946
      %v1193 = vpack.c.b16 %v953, %v947
      %v1194 = vpack.c.b16 %v954, %v948
      %v1195 = vpack.c.b16 %v955, %v949
      %v1196 = vpack.c.b16 %v956, %v950
      %v1197 = vpack.c.b16 %v963, %v957
      %v1198 = vpack.c.b16 %v964, %v958
      %v1199 = vpack.c.b16 %v965, %v959
      %v1200 = vpack.c.b16 %v966, %v960
      %v1201 = vpack.c.b16 %v967, %v961
      %v1202 = vpack.c.b16 %v968, %v962
      %v1203 = vpack.c.b16 %v975, %v969
      %v1204 = vpack.c.b16 %v976, %v970
      %v1205 = vpack.c.b16 %v977, %v971
      %v1206 = vpack.c.b16 %v978, %v972
      %v1207 = vpack.c.b16 %v979, %v973
      %v1208 = vpack.c.b16 %v980, %v974
      %v1209 = vpack.c.b16 %v987, %v981
      %v1210 = vpack.c.b16 %v988, %v982
      %v1211 = vpack.c.b16 %v989, %v983
      %v1212 = vpack.c.b16 %v990, %v984
      %v1213 = vpack.c.b16 %v991, %v985
      %v1214 = vpack.c.b16 %v992, %v986
      %v1215 = vpack.c.b16 %v999, %v993
      %v1216 = vpack.c.b16 %v1000, %v994
      %v1217 = vpack.c.b16 %v1001, %v995
      %v1218 = vpack.c.b16 %v1002, %v996
      %v1219 = vpack.c.b16 %v1003, %v997
      %v1220 = vpack.c.b16 %v1004, %v998
      %v1221 = vpack.c.b16 %v1011, %v1005
      %v1222 = vpack.c.b16 %v1012, %v1006
      %v1223 = vpack.c.b16 %v1013, %v1007
      %v1224 = vpack.c.b16 %v1014, %v1008
      %v1225 = vpack.c.b16 %v1015, %v1009
      %v1226 = vpack.c.b16 %v1016, %v1010
      %v1227 = vpack.c.b16 %v1023, %v1017
      %v1228 = vpack.c.b16 %v1024, %v1018
      %v1229 = vpack.c.b16 %v1025, %v1019
      %v1230 = vpack.c.b16 %v1026, %v1020
      %v1231 = vpack.c.b16 %v1027, %v1021
      %v1232 = vpack.c.b16 %v1028, %v1022
      %v1233 = vpack.c.b16 %v1035, %v1029
      %v1234 = vpack.c.b16 %v1036, %v1030
      %v1235 = vpack.c.b16 %v1037, %v1031
      %v1236 = vpack.c.b16 %v1038, %v1032
      %v1237 = vpack.c.b16 %v1039, %v1033
      %v1238 = vpack.c.b16 %v1040, %v1034
      %v1239 = vpack.c.b16 %v1047, %v1041
      %v1240 = vpack.c.b16 %v1048, %v1042
      %v1241 = vpack.c.b16 %v1049, %v1043
      %v1242 = vpack.c.b16 %v1050, %v1044
      %v1243 = vpack.c.b16 %v1051, %v1045
      %v1244 = vpack.c.b16 %v1052, %v1046
      %1437 = vmatprep.subr.bf16.mxu0 %v1054
      %1438 = vmatpush1.bf16.msra.mxu0 %v1053
      %1439 = vmatprep.subr.bf16.mxu0 %v1060
      %1440 = vmatpush1.bf16.msra.mxu0 %v1059
      %1441 = vmatprep.subr.bf16.mxu0 %v1066
      %1442 = vmatpush1.bf16.msra.mxu0 %v1065
      %1443 = vmatprep.subr.bf16.mxu0 %v1072
      %1444 = vmatpush1.bf16.msra.mxu0 %v1071
      %1445 = vmatprep.subr.bf16.mxu0 %v1078
      %1446 = vmatpush1.bf16.msra.mxu0 %v1077
      %1447 = vmatprep.subr.bf16.mxu0 %v1084
      %1448 = vmatpush1.bf16.msra.mxu0 %v1083
      %1449 = vmatprep.subr.bf16.mxu0 %v1090
      %1450 = vmatpush1.bf16.msra.mxu0 %v1089
      %1451 = vmatprep.subr.bf16.mxu0 %v1096
      %1452 = vmatpush1.bf16.msra.mxu0 %v1095
      %1453 = vmatprep.subr.bf16.mxu0 %v1102
      %1454 = vmatpush1.bf16.msra.mxu0 %v1101
      %1455 = vmatprep.subr.bf16.mxu0 %v1108
      %1456 = vmatpush1.bf16.msra.mxu0 %v1107
      %1457 = vmatprep.subr.bf16.mxu0 %v1114
      %1458 = vmatpush1.bf16.msra.mxu0 %v1113
      %1459 = vmatprep.subr.bf16.mxu0 %v1120
      %1460 = vmatpush1.bf16.msra.mxu0 %v1119
      %1461 = vmatprep.subr.bf16.mxu0 %v1126
      %1462 = vmatpush1.bf16.msra.mxu0 %v1125
      %1463 = vmatprep.subr.bf16.mxu0 %v1132
      %1464 = vmatpush1.bf16.msra.mxu0 %v1131
      %1465 = vmatprep.subr.bf16.mxu0 %v1138
      %1466 = vmatpush1.bf16.msra.mxu0 %v1137
      %1467 = vmatprep.subr.bf16.mxu0 %v1144
      %1468 = vmatpush1.bf16.msra.mxu0 %v1143
      %1469 = vmatprep.mubr.bf16.mxu0 %v470
      %1470 = vmatmul.mubr.bf16.gmra.mrb[0].mxu0 %v469
      %v1471 = vpop.f32.mrb[0].mxu0
      %v1472 = vadd.f32 0.0, %v1471
      %v1473 = vpop.f32.mrb[0].mxu0
      %v1474 = vadd.f32 0.0, %v1473
      %v1475 = vpop.f32.mrb[0].mxu0
      %v1476 = vadd.f32 0.0, %v1475
      %v1477 = vpop.f32.mrb[0].mxu0
      %v1478 = vadd.f32 0.0, %v1477
      %1479 = vdwg.mxu0
      %1480 = vmatprep.subr.bf16.mxu0 %v1150
      %1481 = vmatpush1.bf16.msra.mxu0 %v1149
      %1482 = vmatprep.subr.bf16.mxu0 %v1156
      %1483 = vmatpush1.bf16.msra.mxu0 %v1155
      %1484 = vmatprep.subr.bf16.mxu0 %v1162
      %1485 = vmatpush1.bf16.msra.mxu0 %v1161
      %1486 = vmatprep.subr.bf16.mxu0 %v1168
      %1487 = vmatpush1.bf16.msra.mxu0 %v1167
      %1488 = vmatprep.subr.bf16.mxu0 %v1174
      %1489 = vmatpush1.bf16.msra.mxu0 %v1173
      %1490 = vmatprep.subr.bf16.mxu0 %v1180
      %1491 = vmatpush1.bf16.msra.mxu0 %v1179
      %1492 = vmatprep.subr.bf16.mxu0 %v1186
      %1493 = vmatpush1.bf16.msra.mxu0 %v1185
      %1494 = vmatprep.subr.bf16.mxu0 %v1192
      %1495 = vmatpush1.bf16.msra.mxu0 %v1191
      %1496 = vmatprep.subr.bf16.mxu0 %v1198
      %1497 = vmatpush1.bf16.msra.mxu0 %v1197
      %1498 = vmatprep.subr.bf16.mxu0 %v1204
      %1499 = vmatpush1.bf16.msra.mxu0 %v1203
      %1500 = vmatprep.subr.bf16.mxu0 %v1210
      %1501 = vmatpush1.bf16.msra.mxu0 %v1209
      %1502 = vmatprep.subr.bf16.mxu0 %v1216
      %1503 = vmatpush1.bf16.msra.mxu0 %v1215
      %1504 = vmatprep.subr.bf16.mxu0 %v1222
      %1505 = vmatpush1.bf16.msra.mxu0 %v1221
      %1506 = vmatprep.subr.bf16.mxu0 %v1228
      %1507 = vmatpush1.bf16.msra.mxu0 %v1227
      %1508 = vmatprep.subr.bf16.mxu0 %v1234
      %1509 = vmatpush1.bf16.msra.mxu0 %v1233
      %1510 = vmatprep.subr.bf16.mxu0 %v1240
      %1511 = vmatpush1.bf16.msra.mxu0 %v1239
      %1512 = vmatprep.mubr.bf16.mxu0 %v472
      %1513 = vmatmul.mubr.bf16.gmra.mrb[0].mxu0 %v471
      %v1514 = vpop.f32.mrb[0].mxu0
      %v1515 = vadd.f32 %v1472, %v1514
      %v1516 = vpop.f32.mrb[0].mxu0
      %v1517 = vadd.f32 %v1474, %v1516
      %v1518 = vpop.f32.mrb[0].mxu0
      %v1519 = vadd.f32 %v1476, %v1518
      %v1520 = vpop.f32.mrb[0].mxu0
      %v1521 = vadd.f32 %v1478, %v1520
      %1522 = vdwg.mxu0
      %1523 = vmatprep.subr.bf16.mxu0 %v1056
      %1524 = vmatpush1.bf16.msra.mxu0 %v1055
      %1525 = vmatprep.subr.bf16.mxu0 %v1062
      %1526 = vmatpush1.bf16.msra.mxu0 %v1061
      %1527 = vmatprep.subr.bf16.mxu0 %v1068
      %1528 = vmatpush1.bf16.msra.mxu0 %v1067
      %1529 = vmatprep.subr.bf16.mxu0 %v1074
      %1530 = vmatpush1.bf16.msra.mxu0 %v1073
      %1531 = vmatprep.subr.bf16.mxu0 %v1080
      %1532 = vmatpush1.bf16.msra.mxu0 %v1079
      %1533 = vmatprep.subr.bf16.mxu0 %v1086
      %1534 = vmatpush1.bf16.msra.mxu0 %v1085
      %1535 = vmatprep.subr.bf16.mxu0 %v1092
      %1536 = vmatpush1.bf16.msra.mxu0 %v1091
      %1537 = vmatprep.subr.bf16.mxu0 %v1098
      %1538 = vmatpush1.bf16.msra.mxu0 %v1097
      %1539 = vmatprep.subr.bf16.mxu0 %v1104
      %1540 = vmatpush1.bf16.msra.mxu0 %v1103
      %1541 = vmatprep.subr.bf16.mxu0 %v1110
      %1542 = vmatpush1.bf16.msra.mxu0 %v1109
      %1543 = vmatprep.subr.bf16.mxu0 %v1116
      %1544 = vmatpush1.bf16.msra.mxu0 %v1115
      %1545 = vmatprep.subr.bf16.mxu0 %v1122
      %1546 = vmatpush1.bf16.msra.mxu0 %v1121
      %1547 = vmatprep.subr.bf16.mxu0 %v1128
      %1548 = vmatpush1.bf16.msra.mxu0 %v1127
      %1549 = vmatprep.subr.bf16.mxu0 %v1134
      %1550 = vmatpush1.bf16.msra.mxu0 %v1133
      %1551 = vmatprep.subr.bf16.mxu0 %v1140
      %1552 = vmatpush1.bf16.msra.mxu0 %v1139
      %1553 = vmatprep.subr.bf16.mxu0 %v1146
      %1554 = vmatpush1.bf16.msra.mxu0 %v1145
      %1555 = vmatprep.mubr.bf16.mxu0 %v470
      %1556 = vmatmul.mubr.bf16.gmra.mrb[0].mxu0 %v469
      %v1557 = vpop.f32.mrb[0].mxu0
      %v1558 = vadd.f32 0.0, %v1557
      %v1559 = vpop.f32.mrb[0].mxu0
      %v1560 = vadd.f32 0.0, %v1559
      %v1561 = vpop.f32.mrb[0].mxu0
      %v1562 = vadd.f32 0.0, %v1561
      %v1563 = vpop.f32.mrb[0].mxu0
      %v1564 = vadd.f32 0.0, %v1563
      %1565 = vdwg.mxu0
      %1566 = vmatprep.subr.bf16.mxu0 %v1152
      %1567 = vmatpush1.bf16.msra.mxu0 %v1151
      %1568 = vmatprep.subr.bf16.mxu0 %v1158
      %1569 = vmatpush1.bf16.msra.mxu0 %v1157
      %1570 = vmatprep.subr.bf16.mxu0 %v1164
      %1571 = vmatpush1.bf16.msra.mxu0 %v1163
      %1572 = vmatprep.subr.bf16.mxu0 %v1170
      %1573 = vmatpush1.bf16.msra.mxu0 %v1169
      %1574 = vmatprep.subr.bf16.mxu0 %v1176
      %1575 = vmatpush1.bf16.msra.mxu0 %v1175
      %1576 = vmatprep.subr.bf16.mxu0 %v1182
      %1577 = vmatpush1.bf16.msra.mxu0 %v1181
      %1578 = vmatprep.subr.bf16.mxu0 %v1188
      %1579 = vmatpush1.bf16.msra.mxu0 %v1187
      %1580 = vmatprep.subr.bf16.mxu0 %v1194
      %1581 = vmatpush1.bf16.msra.mxu0 %v1193
      %1582 = vmatprep.subr.bf16.mxu0 %v1200
      %1583 = vmatpush1.bf16.msra.mxu0 %v1199
      %1584 = vmatprep.subr.bf16.mxu0 %v1206
      %1585 = vmatpush1.bf16.msra.mxu0 %v1205
      %1586 = vmatprep.subr.bf16.mxu0 %v1212
      %1587 = vmatpush1.bf16.msra.mxu0 %v1211
      %1588 = vmatprep.subr.bf16.mxu0 %v1218
      %1589 = vmatpush1.bf16.msra.mxu0 %v1217
      %1590 = vmatprep.subr.bf16.mxu0 %v1224
      %1591 = vmatpush1.bf16.msra.mxu0 %v1223
      %1592 = vmatprep.subr.bf16.mxu0 %v1230
      %1593 = vmatpush1.bf16.msra.mxu0 %v1229
      %1594 = vmatprep.subr.bf16.mxu0 %v1236
      %1595 = vmatpush1.bf16.msra.mxu0 %v1235
      %1596 = vmatprep.subr.bf16.mxu0 %v1242
      %1597 = vmatpush1.bf16.msra.mxu0 %v1241
      %1598 = vmatprep.mubr.bf16.mxu0 %v472
      %1599 = vmatmul.mubr.bf16.gmra.mrb[0].mxu0 %v471
      %v1600 = vpop.f32.mrb[0].mxu0
      %v1601 = vadd.f32 %v1558, %v1600
      %v1602 = vpop.f32.mrb[0].mxu0
      %v1603 = vadd.f32 %v1560, %v1602
      %v1604 = vpop.f32.mrb[0].mxu0
      %v1605 = vadd.f32 %v1562, %v1604
      %v1606 = vpop.f32.mrb[0].mxu0
      %v1607 = vadd.f32 %v1564, %v1606
      %1608 = vdwg.mxu0
      %1609 = vmatprep.subr.bf16.mxu0 %v1058
      %1610 = vmatpush1.bf16.msra.mxu0 %v1057
      %1611 = vmatprep.subr.bf16.mxu0 %v1064
      %1612 = vmatpush1.bf16.msra.mxu0 %v1063
      %1613 = vmatprep.subr.bf16.mxu0 %v1070
      %1614 = vmatpush1.bf16.msra.mxu0 %v1069
      %1615 = vmatprep.subr.bf16.mxu0 %v1076
      %1616 = vmatpush1.bf16.msra.mxu0 %v1075
      %1617 = vmatprep.subr.bf16.mxu0 %v1082
      %1618 = vmatpush1.bf16.msra.mxu0 %v1081
      %1619 = vmatprep.subr.bf16.mxu0 %v1088
      %1620 = vmatpush1.bf16.msra.mxu0 %v1087
      %1621 = vmatprep.subr.bf16.mxu0 %v1094
      %1622 = vmatpush1.bf16.msra.mxu0 %v1093
      %1623 = vmatprep.subr.bf16.mxu0 %v1100
      %1624 = vmatpush1.bf16.msra.mxu0 %v1099
      %1625 = vmatprep.subr.bf16.mxu0 %v1106
      %1626 = vmatpush1.bf16.msra.mxu0 %v1105
      %1627 = vmatprep.subr.bf16.mxu0 %v1112
      %1628 = vmatpush1.bf16.msra.mxu0 %v1111
      %1629 = vmatprep.subr.bf16.mxu0 %v1118
      %1630 = vmatpush1.bf16.msra.mxu0 %v1117
      %1631 = vmatprep.subr.bf16.mxu0 %v1124
      %1632 = vmatpush1.bf16.msra.mxu0 %v1123
      %1633 = vmatprep.subr.bf16.mxu0 %v1130
      %1634 = vmatpush1.bf16.msra.mxu0 %v1129
      %1635 = vmatprep.subr.bf16.mxu0 %v1136
      %1636 = vmatpush1.bf16.msra.mxu0 %v1135
      %1637 = vmatprep.subr.bf16.mxu0 %v1142
      %1638 = vmatpush1.bf16.msra.mxu0 %v1141
      %1639 = vmatprep.subr.bf16.mxu0 %v1148
      %1640 = vmatpush1.bf16.msra.mxu0 %v1147
      %1641 = vmatprep.mubr.bf16.mxu0 %v470
      %1642 = vmatmul.mubr.bf16.gmra.mrb[0].mxu0 %v469
      %v1643 = vpop.f32.mrb[0].mxu0
      %v1644 = vadd.f32 0.0, %v1643
      %v1645 = vpop.f32.mrb[0].mxu0
      %v1646 = vadd.f32 0.0, %v1645
      %v1647 = vpop.f32.mrb[0].mxu0
      %v1648 = vadd.f32 0.0, %v1647
      %v1649 = vpop.f32.mrb[0].mxu0
      %v1650 = vadd.f32 0.0, %v1649
      %1651 = vdwg.mxu0
      %1652 = vmatprep.subr.bf16.mxu0 %v1154
      %1653 = vmatpush1.bf16.msra.mxu0 %v1153
      %1654 = vmatprep.subr.bf16.mxu0 %v1160
      %1655 = vmatpush1.bf16.msra.mxu0 %v1159
      %1656 = vmatprep.subr.bf16.mxu0 %v1166
      %1657 = vmatpush1.bf16.msra.mxu0 %v1165
      %1658 = vmatprep.subr.bf16.mxu0 %v1172
      %1659 = vmatpush1.bf16.msra.mxu0 %v1171
      %1660 = vmatprep.subr.bf16.mxu0 %v1178
      %1661 = vmatpush1.bf16.msra.mxu0 %v1177
      %1662 = vmatprep.subr.bf16.mxu0 %v1184
      %1663 = vmatpush1.bf16.msra.mxu0 %v1183
      %1664 = vmatprep.subr.bf16.mxu0 %v1190
      %1665 = vmatpush1.bf16.msra.mxu0 %v1189
      %1666 = vmatprep.subr.bf16.mxu0 %v1196
      %1667 = vmatpush1.bf16.msra.mxu0 %v1195
      %1668 = vmatprep.subr.bf16.mxu0 %v1202
      %1669 = vmatpush1.bf16.msra.mxu0 %v1201
      %1670 = vmatprep.subr.bf16.mxu0 %v1208
      %1671 = vmatpush1.bf16.msra.mxu0 %v1207
      %1672 = vmatprep.subr.bf16.mxu0 %v1214
      %1673 = vmatpush1.bf16.msra.mxu0 %v1213
      %1674 = vmatprep.subr.bf16.mxu0 %v1220
      %1675 = vmatpush1.bf16.msra.mxu0 %v1219
      %1676 = vmatprep.subr.bf16.mxu0 %v1226
      %1677 = vmatpush1.bf16.msra.mxu0 %v1225
      %1678 = vmatprep.subr.bf16.mxu0 %v1232
      %1679 = vmatpush1.bf16.msra.mxu0 %v1231
      %1680 = vmatprep.subr.bf16.mxu0 %v1238
      %1681 = vmatpush1.bf16.msra.mxu0 %v1237
      %1682 = vmatprep.subr.bf16.mxu0 %v1244
      %1683 = vmatpush1.bf16.msra.mxu0 %v1243
      %1684 = vmatprep.mubr.bf16.mxu0 %v472
      %1685 = vmatmul.mubr.bf16.gmra.mrb[0].mxu0 %v471
      %v1686 = vpop.f32.mrb[0].mxu0
      %v1687 = vadd.f32 %v1644, %v1686
      %v1688 = vpop.f32.mrb[0].mxu0
      %v1689 = vadd.f32 %v1646, %v1688
      %v1690 = vpop.f32.mrb[0].mxu0
      %v1691 = vadd.f32 %v1648, %v1690
      %v1692 = vpop.f32.mrb[0].mxu0
      %v1693 = vadd.f32 %v1650, %v1692
      %1694 = vdwg.mxu0
      %v1695 = vmul.f32 %v1515, %v1515
      %v1696 = vmul.f32 %v1517, %v1517
      %v1697 = vmul.f32 %v1601, %v1601
      %v1698 = vmul.f32 %v1603, %v1603
      %v1699 = vmul.f32 %v1687, %v1687
      %v1700 = vmul.f32 %v1689, %v1689
      %v1701 = vadd.f32 %v1695, %v1698
      %v1702 = vadd.f32 %v1696, %v1699
      %v1703 = vadd.f32 %v1697, %v1700
      %v1704 = vmul.f32 %v1519, %v1519
      %v1705 = vmul.f32 %v1521, %v1521
      %v1706 = vmul.f32 %v1605, %v1605
      %v1707 = vmul.f32 %v1607, %v1607
      %v1708 = vmul.f32 %v1691, %v1691
      %v1709 = vmul.f32 %v1693, %v1693
      %v1710 = vadd.f32 %v1704, %v1707
      %v1711 = vadd.f32 %v1705, %v1708
      %v1712 = vadd.f32 %v1706, %v1709
      %v1713 = vld [vmem:[%s3] sm:$0xff]
      %vm1714 = vcmask 64512
      %v1716 = vsel %vm1714, %v1713, 0
      %1718 = vmatprep.subr.mxu0 %v1702
      %1719 = vmatpush1.msra.mxu0 %v1701
      %1720 = vmatprep.subr.mxu0 0.0
      %1721 = vmatpush1.msra.mxu0 0.0
      %1722 = vmatprep.subr.mxu0 0.0
      %1723 = vmatpush1.msra.mxu0 0.0
      %1724 = vmatprep.subr.mxu0 0.0
      %1725 = vmatpush1.msra.mxu0 0.0
      %1726 = vmatprep.subr.mxu0 0.0
      %1727 = vmatpush1.msra.mxu0 0.0
      %1728 = vmatprep.subr.mxu0 0.0
      %1729 = vmatpush1.msra.mxu0 0.0
      %1730 = vmatprep.subr.mxu0 0.0
      %1731 = vmatpush1.msra.mxu0 0.0
      %1732 = vmatprep.subr.mxu0 0.0
      %1733 = vmatpush1.msra.mxu0 0.0
      %1734 = vmatprep.subr.mxu0 0.0
      %1735 = vmatpush1.msra.mxu0 0.0
      %1736 = vmatprep.subr.mxu0 0.0
      %1737 = vmatpush1.msra.mxu0 0.0
      %1738 = vmatprep.subr.mxu0 0.0
      %1739 = vmatpush1.msra.mxu0 0.0
      %1740 = vmatprep.subr.mxu0 0.0
      %1741 = vmatpush1.msra.mxu0 0.0
      %1742 = vmatprep.subr.mxu0 0.0
      %1743 = vmatpush1.msra.mxu0 0.0
      %1744 = vmatprep.subr.mxu0 0.0
      %1745 = vmatpush1.msra.mxu0 0.0
      %1746 = vmatprep.subr.mxu0 0.0
      %1747 = vmatpush1.msra.mxu0 0.0
      %1748 = vmatprep.subr.mxu0 0.0
      %1749 = vmatpush1.msra.mxu0 0.0
      %1750 = vmatprep.subr.mxu0 0.0
      %1751 = vmatpush1.msra.mxu0 0.0
      %1752 = vmatprep.subr.mxu0 0.0
      %1753 = vmatpush1.msra.mxu0 0.0
      %1754 = vmatprep.subr.mxu0 0.0
      %1755 = vmatpush1.msra.mxu0 0.0
      %1756 = vmatprep.subr.mxu0 0.0
      %1757 = vmatpush1.msra.mxu0 0.0
      %1758 = vmatprep.subr.mxu0 0.0
      %1759 = vmatpush1.msra.mxu0 0.0
      %1760 = vmatprep.subr.mxu0 0.0
      %1761 = vmatpush1.msra.mxu0 0.0
      %1762 = vmatprep.subr.mxu0 0.0
      %1763 = vmatpush1.msra.mxu0 0.0
      %1764 = vmatprep.subr.mxu0 0.0
      %1765 = vmatpush1.msra.mxu0 0.0
      %1766 = vmatprep.subr.mxu0 0.0
      %1767 = vmatpush1.msra.mxu0 0.0
      %1768 = vmatprep.subr.mxu0 0.0
      %1769 = vmatpush1.msra.mxu0 0.0
      %1770 = vmatprep.subr.mxu0 0.0
      %1771 = vmatpush1.msra.mxu0 0.0
      %1772 = vmatprep.subr.mxu0 0.0
      %1773 = vmatpush1.msra.mxu0 0.0
      %1774 = vmatprep.subr.mxu0 0.0
      %1775 = vmatpush1.msra.mxu0 0.0
      %1776 = vmatprep.subr.mxu0 0.0
      %1777 = vmatpush1.msra.mxu0 0.0
      %1778 = vmatprep.subr.mxu0 0.0
      %1779 = vmatpush1.msra.mxu0 0.0
      %1780 = vmatprep.subr.mxu0 0.0
      %1781 = vmatpush1.msra.mxu0 0.0
      %1782 = vmatprep.mubr.f32.mxu0 0.0
      %1783 = vmatmul.mubr.f32.gmra.mrb[0].mxu0 %v1716
      %v1784 = vpop.f32.mrb[0].mxu0
      %v1785 = vadd.f32 1.1920929e-07, %v1784
      %v1786 = vpop.f32.mrb[0].mxu0
      %v1787 = vadd.f32 1.1920929e-07, %v1786
      %1788 = vdwg.mxu0
      %1789 = vmatprep.subr.mxu0 0.0
      %1790 = vmatpush1.msra.mxu0 %v1703
      %1791 = vmatprep.subr.mxu0 0.0
      %1792 = vmatpush1.msra.mxu0 0.0
      %1793 = vmatprep.subr.mxu0 0.0
      %1794 = vmatpush1.msra.mxu0 0.0
      %1795 = vmatprep.subr.mxu0 0.0
      %1796 = vmatpush1.msra.mxu0 0.0
      %1797 = vmatprep.subr.mxu0 0.0
      %1798 = vmatpush1.msra.mxu0 0.0
      %1799 = vmatprep.subr.mxu0 0.0
      %1800 = vmatpush1.msra.mxu0 0.0
      %1801 = vmatprep.subr.mxu0 0.0
      %1802 = vmatpush1.msra.mxu0 0.0
      %1803 = vmatprep.subr.mxu0 0.0
      %1804 = vmatpush1.msra.mxu0 0.0
      %1805 = vmatprep.subr.mxu0 0.0
      %1806 = vmatpush1.msra.mxu0 0.0
      %1807 = vmatprep.subr.mxu0 0.0
      %1808 = vmatpush1.msra.mxu0 0.0
      %1809 = vmatprep.subr.mxu0 0.0
      %1810 = vmatpush1.msra.mxu0 0.0
      %1811 = vmatprep.subr.mxu0 0.0
      %1812 = vmatpush1.msra.mxu0 0.0
      %1813 = vmatprep.subr.mxu0 0.0
      %1814 = vmatpush1.msra.mxu0 0.0
      %1815 = vmatprep.subr.mxu0 0.0
      %1816 = vmatpush1.msra.mxu0 0.0
      %1817 = vmatprep.subr.mxu0 0.0
      %1818 = vmatpush1.msra.mxu0 0.0
      %1819 = vmatprep.subr.mxu0 0.0
      %1820 = vmatpush1.msra.mxu0 0.0
      %1821 = vmatprep.subr.mxu0 0.0
      %1822 = vmatpush1.msra.mxu0 0.0
      %1823 = vmatprep.subr.mxu0 0.0
      %1824 = vmatpush1.msra.mxu0 0.0
      %1825 = vmatprep.subr.mxu0 0.0
      %1826 = vmatpush1.msra.mxu0 0.0
      %1827 = vmatprep.subr.mxu0 0.0
      %1828 = vmatpush1.msra.mxu0 0.0
      %1829 = vmatprep.subr.mxu0 0.0
      %1830 = vmatpush1.msra.mxu0 0.0
      %1831 = vmatprep.subr.mxu0 0.0
      %1832 = vmatpush1.msra.mxu0 0.0
      %1833 = vmatprep.subr.mxu0 0.0
      %1834 = vmatpush1.msra.mxu0 0.0
      %1835 = vmatprep.subr.mxu0 0.0
      %1836 = vmatpush1.msra.mxu0 0.0
      %1837 = vmatprep.subr.mxu0 0.0
      %1838 = vmatpush1.msra.mxu0 0.0
      %1839 = vmatprep.subr.mxu0 0.0
      %1840 = vmatpush1.msra.mxu0 0.0
      %1841 = vmatprep.subr.mxu0 0.0
      %1842 = vmatpush1.msra.mxu0 0.0
      %1843 = vmatprep.subr.mxu0 0.0
      %1844 = vmatpush1.msra.mxu0 0.0
      %1845 = vmatprep.subr.mxu0 0.0
      %1846 = vmatpush1.msra.mxu0 0.0
      %1847 = vmatprep.subr.mxu0 0.0
      %1848 = vmatpush1.msra.mxu0 0.0
      %1849 = vmatprep.subr.mxu0 0.0
      %1850 = vmatpush1.msra.mxu0 0.0
      %1851 = vmatprep.subr.mxu0 0.0
      %1852 = vmatpush1.msra.mxu0 0.0
      %1853 = vmatprep.mubr.f32.mxu0 0.0
      %1854 = vmatmul.mubr.f32.gmra.mrb[0].mxu0 %v1716
      %v1855 = vpop.f32.mrb[0].mxu0
      %v1856 = vadd.f32 1.1920929e-07, %v1855
      %v1857 = vpop.f32.mrb[0].mxu0
      %1858 = vdwg.mxu0
      %v1859 = vrcp.pop %v1785
      %v1860 = vmul.f32 %v1710, %v1859
      %v1861 = vrcp.pop %v1787
      %v1862 = vmul.f32 %v1711, %v1861
      %v1863 = vrcp.pop %v1856
      %v1864 = vmul.f32 %v1712, %v1863
      %v1865 = vsub.f32 0.0, %v1860
      %v1866 = vsub.f32 0.0, %v1862
      %v1867 = vsub.f32 0.0, %v1864
      %v1868 = vmul.f32 %v1865, 0.9693466
      %v1869 = vmul.f32 %v1866, 0.9693466
      %v1870 = vmul.f32 %v1867, 0.9693466
      %v1871 = vmul.f32 %v1868, 1.442695
      %v1872 = vpow.pop %v1871
      %v1873 = vmul.f32 %v1869, 1.442695
      %v1874 = vpow.pop %v1873
      %v1875 = vmul.f32 %v1870, 1.442695
      %v1876 = vpow.pop %v1875
      %v1877 = vmul.f32 %v1872, 32.622776
      %v1878 = vmul.f32 %v1874, 32.622776
      %v1879 = vmul.f32 %v1876, 32.622776
      %v1880 = vadd.f32 %v1877, 1.0
      %v1881 = vadd.f32 %v1878, 1.0
      %v1882 = vadd.f32 %v1879, 1.0
      %v1883 = vrcp.pop %v1880
      %v1884 = vrcp.pop %v1881
      %v1885 = vrcp.pop %v1882
      %v1886 = vmul.f32 %v1880, %v1883
      %v1887 = vmul.f32 %v1881, %v1884
      %v1888 = vmul.f32 %v1882, %v1885
      %v1889 = vsub.f32 2.0, %v1886
      %v1890 = vsub.f32 2.0, %v1887
      %v1891 = vsub.f32 2.0, %v1888
      %v1892 = vmul.f32 %v1883, %v1889
      %v1893 = vmul.f32 %v1884, %v1890
      %v1894 = vmul.f32 %v1885, %v1891
      %1895 = vst [vmem:[%s256] sm:$0xff] %v1892
      %1896 = vst [vmem:[%s256 + $0x8] sm:$0xff] %v1893
      %1897 = vst [vmem:[%s256 + $0x10] sm:$0xff] %v1894
      %v1898 = vlaneseq
      %v1899 = vand.u32 %v1898, 127
      %v1900 = vadd.s32 %v1899, 128
      %v1901 = vadd.s32 %v1899, 256
      %vm1902 = vcmp.lt.s32.totalorder %v1899, 257
      %vm1903 = vcmp.lt.s32.totalorder %v1900, 257
      %vm1904 = vcmp.lt.s32.totalorder %v1901, 257
      %v1905 = vld [vmem:[%s251] sm:$0xff]
      %v1906 = vld [vmem:[%s251 + $0x8] sm:$0xff]
      %v1907 = vld [vmem:[%s251 + $0x10] sm:$0xff]
      %v1908 = vsub.f32 %v1905, %v1892
      %v1909 = vsub.f32 %v1906, %v1893
      %v1910 = vsub.f32 %v1907, %v1894
      %v1911 = vsel %vm1902, %v1908, 0.0
      %v1912 = vsel %vm1903, %v1909, 0.0
      %v1913 = vsel %vm1904, %v1910, 0.0
      %v1914 = vmul.f32 %v1911, %v1911
      %v1915 = vmul.f32 %v1912, %v1912
      %v1916 = vmul.f32 %v1913, %v1913
      %v1917 = vadd.f32 %v1914, %v1915
      %v1918 = vadd.f32 %v1917, %v1916
      %1919 = vadd.xlane.f32.xlu0 %v1918
      %v1920 = vpop.xlane.xlu0 %1919
      %v1921 = vrot.slane %v1920, 4
      %v1922 = vadd.f32 %v1920, %v1921
      %v1923 = vrot.slane %v1922, 2
      %v1924 = vadd.f32 %v1922, %v1923
      %v1925 = vrot.slane %v1924, 1
      %v1926 = vadd.f32 %v1924, %v1925
      %s1927 = vtos %v1926
      %v1928 = vstv %s1927
      %v1929 = vadd.f32 %v1928, 0.0
      %1930 = vst [vmem:[%s260] sm:$0xff] %v1929
      %p1931 = scmp.lt.s32.totalorder %s17, 1
      %s1932 = scalar_select %p1931, %s17, 1
      %s1933 = smul.addr %s1932, 3
      %s1934 = smul.addr %s1933, 8
      %s1935 = scalar_lea.vmem %s4, %s1934
      %p1936 = scmp.lt.s32.totalorder %s17, 1
      %s1937 = scalar_select %p1936, %s17, 1
      %s1938 = smul.addr %s1937, 8
      %s1939 = scalar_lea.vmem %s5, %s1938
      // Predicated region
      $region37: #{spp_mse_pallas.1} parent=35 // pred_check
        %p1940 = pneg %p129
      $region38: #{spp_mse_pallas.1} parent=35 // pred_check_branch
        %1942 = sbr.rel (%p1940) target = $region40
      $region39: #{spp_mse_pallas.1} parent=35 // pred_region
        _
      $region40: #{spp_mse_pallas.1} parent=35 // pred_fallthru
        _
      // Predicated region
      $region41: #{spp_mse_pallas.1} parent=35 // pred_check
        %p1943 = pneg %p155
      $region42: #{spp_mse_pallas.1} parent=35 // pred_check_branch
        %1945 = sbr.rel (%p1943) target = $region44
      $region43: #{spp_mse_pallas.1} parent=35 // pred_region
        _
      $region44: #{spp_mse_pallas.1} parent=35 // pred_fallthru
        _
    $region36: #{spp_mse_pallas.1} parent=5 // pred_fallthru
      _
    %p1946 = scmp.le.s32.totalorder 2, %s12
    // Predicated region
    $region45: #{spp_mse_pallas.1} parent=5 // pred_check
      %p1947 = pneg %p1946
    $region46: #{spp_mse_pallas.1} parent=5 // pred_check_branch
      %1949 = sbr.rel (%p1947) target = $region48
    $region47: #{spp_mse_pallas.1} parent=5 // pred_region
      %s1950 = ssub.s32 %s12, 2
      // Predicated region
      $region49: #{spp_mse_pallas.1} parent=47 // pred_check
        %p1951 = pneg %p135
      $region50: #{spp_mse_pallas.1} parent=47 // pred_check_branch
        %1953 = sbr.rel (%p1951) target = $region52
      $region51: #{spp_mse_pallas.1} parent=47 // pred_region
        %p1954 = scmp.lt.s32.totalorder %s18, 1
        %s1955 = scalar_select %p1954, %s18, 1
        %s1956 = smul.addr %s1955, 3
        %s1957 = smul.addr %s1956, 8
        %s1958 = scalar_lea.vmem %s4, %s1957
      $region52: #{spp_mse_pallas.1} parent=47 // pred_fallthru
        _
      // Predicated region
      $region53: #{spp_mse_pallas.1} parent=47 // pred_check
        %p1959 = pneg %p161
      $region54: #{spp_mse_pallas.1} parent=47 // pred_check_branch
        %1961 = sbr.rel (%p1959) target = $region56
      $region55: #{spp_mse_pallas.1} parent=47 // pred_region
        %p1962 = scmp.lt.s32.totalorder %s18, 1
        %s1963 = scalar_select %p1962, %s18, 1
        %s1964 = smul.addr %s1963, 8
        %s1965 = scalar_lea.vmem %s5, %s1964
      $region56: #{spp_mse_pallas.1} parent=47 // pred_fallthru
        _
    $region48: #{spp_mse_pallas.1} parent=5 // pred_fallthru
      _
  $region6: #{spp_mse_pallas.1} parent=0 // loop_footer
    %s16 = sadd.s32 1, %s12
  $region7: #{spp_mse_pallas.1} parent=0 // loop_footer_branch
    %11 = sbr.rel target = $region3
  $region8: #{spp_mse_pallas.1} parent=0 // loop_exit
    _

</llo_original>
